<compile_context>
chip_gen: v5e
topology: v5e:2x2
jax: 0.10.0
libtpu: 0.0.40
codegen_flags: <defaults>
</compile_context>

<pallas_src>
import jax
import jax.numpy as jnp
import numpy as np
from jax.experimental import pallas as pl
from jax.experimental.pallas import tpu as pltpu


# ----------------------------- kernels ------------------------------------ #

def _rb_kernel_proj(x_ref, wcat_ref, bcat_ref, w2_ref, b2_ref, o_ref):
    """Projection shortcut: one fused x @ [w1 | ws] matmul, then split."""
    out_f = o_ref.shape[-1]
    xm = x_ref[...].astype(wcat_ref.dtype)            # matmul input dtype (bf16/f32)

    # Linear1+BN1 and shortcut Linear+BN share LHS and K=in_f -> single MXU pass.
    fused = jnp.dot(xm, wcat_ref[...], preferred_element_type=jnp.float32) + bcat_ref[...]
    h = jnp.maximum(fused[:, :out_f], 0.0)            # Linear1 + folded-BN1 + ReLU
    identity = fused[:, out_f:]                       # shortcut Linear + folded-BN
    # dropout is identity in eval mode.

    out = jnp.dot(h.astype(w2_ref.dtype), w2_ref[...],
                  preferred_element_type=jnp.float32) + b2_ref[...]
    o_ref[...] = jnp.maximum(out + identity, 0.0).astype(o_ref.dtype)


def _rb_kernel_identity(x_ref, w1_ref, b1_ref, w2_ref, b2_ref, o_ref):
    """Identity shortcut (in_features == out_features): no shortcut matmul."""
    x = x_ref[...]
    identity = x.astype(jnp.float32)                  # shortcut is a no-op Sequential()
    xm = x.astype(w1_ref.dtype)

    h = jnp.dot(xm, w1_ref[...], preferred_element_type=jnp.float32) + b1_ref[...]
    h = jnp.maximum(h, 0.0)                           # dropout is identity in eval mode

    out = jnp.dot(h.astype(w2_ref.dtype), w2_ref[...],
                  preferred_element_type=jnp.float32) + b2_ref[...]
    o_ref[...] = jnp.maximum(out + identity, 0.0).astype(o_ref.dtype)


# ----------------------------- wrapper ------------------------------------ #

def _round8(n):
    return max(8, (n // 8) * 8)


def _default_tm(B):
    # >= 4 batch tiles so dual-TC parts get >= 2 tiles/core and the activation
    # DMA double-buffers; capped at 512 rows.  Sweep upward on 1-TC chips.
    if B <= 32:
        return B
    return min(512, _round8(B // 4))


def _vmem_limit_bytes():
    try:
        cap = pltpu.get_tpu_info().vmem_capacity_bytes
    except Exception:
        cap = 64 * 1024 * 1024
    # Leave ~25% headroom for compiler-internal scratch / pipeline buffers.
    return int(cap * 0.75)


def residual_block(x, params, *, tm=None, out_dtype=jnp.float32,
                   single_buffer_weights=True):
    """x: [B, in_features].  params: kernel_params from make_params()."""
    B, in_f = x.shape
    fused_proj = "wcat" in params
    out_f = params["w2"].shape[1]
    tm = _default_tm(B) if tm is None else max(1, min(tm, B))
    grid = (pl.cdiv(B, tm),)

    if fused_proj:
        kernel = _rb_kernel_proj
        weights = [params["wcat"], params["bcat"], params["w2"], params["b2"]]
    else:
        kernel = _rb_kernel_identity
        weights = [params["w1"], params["b1"], params["w2"], params["b2"]]

    # Advisory cost hint (fused proj matmul has the same flops as 2 separate ones).
    n1 = weights[0].shape[1]                      # out_f or 2*out_f
    flops = 2 * B * in_f * n1 + 2 * B * out_f * out_f
    bytes_accessed = (x.size * x.dtype.itemsize
                      + B * out_f * np.dtype(out_dtype).itemsize
                      + sum(int(w.size) * w.dtype.itemsize for w in weights))
    cost = pl.CostEstimate(flops=flops, transcendentals=0,
                           bytes_accessed=bytes_accessed)

    def build_and_call(single_buffer):
        def resident(arr):
            idx_map = lambda i: (0,) * arr.ndim   # same block every step -> VMEM-resident
            if single_buffer:
                return pl.BlockSpec(arr.shape, idx_map,
                                    pipeline_mode=pl.Buffered(1))
            return pl.BlockSpec(arr.shape, idx_map)

        in_specs = [pl.BlockSpec((tm, in_f), lambda i: (i, 0))]   # activation tile
        in_specs += [resident(w) for w in weights]

        return pl.pallas_call(
            kernel,
            out_shape=jax.ShapeDtypeStruct((B, out_f), out_dtype),
            grid=grid,
            in_specs=in_specs,
            out_specs=pl.BlockSpec((tm, out_f), lambda i: (i, 0)),
            compiler_params=pltpu.CompilerParams(
                dimension_semantics=("parallel",),
                vmem_limit_bytes=_vmem_limit_bytes(),
            ),
            cost_estimate=cost,
        )(x, *weights)

    # TODO(synk): for very large out_f (resident bf16 weights stop fitting VMEM,
    #             ~2-3k features on v7x), add an N-tiling grid axis over columns.
    try:
        return build_and_call(single_buffer_weights)
    except Exception:
        if not single_buffer_weights:
            raise
        return build_and_call(False)   # fall back to default double-buffering


# ------------------------ parameter construction -------------------------- #

def fold_bn(gamma, beta, running_mean, running_var, eps=1e-5):
    scale = gamma / jnp.sqrt(running_var + eps)
    shift = beta - running_mean * scale
    return scale, shift


def _make_linear_bn(key, fin, fout):
    """Linear([fout,fin]) + BatchNorm1d(fout) folded into (W' [fin,fout], b' [1,fout]), f32."""
    kw, kb, kg, kbe, km, kv = jax.random.split(key, 6)
    f32 = jnp.float32
    w = jax.random.normal(kw, (fout, fin), f32) * 0.05      # torch nn.Linear layout
    b = jax.random.normal(kb, (fout,), f32) * 0.05
    gamma = 1.0 + 0.1 * jax.random.normal(kg, (fout,), f32)
    beta = 0.1 * jax.random.normal(kbe, (fout,), f32)
    mean = 0.1 * jax.random.normal(km, (fout,), f32)
    var = jnp.abs(jax.random.normal(kv, (fout,), f32)) + 0.5
    s, t = fold_bn(gamma, beta, mean, var)
    # (x @ W.T + b) * s + t  ==  x @ (W.T * s) + (b * s + t)
    return w.T * s[None, :], (b * s + t)[None, :]


def make_params(key, in_features, out_features, matmul_dtype=jnp.bfloat16):
    """Returns (kernel_params, ref_params).

    kernel_params: BN-folded weights pre-cast to matmul_dtype once (bf16 default),
    biases kept f32, and the projection-shortcut weight fused into wcat/bcat.
    ref_params: unfused f32 copies for the pure-JAX reference.
    """
    k1, k2, k3 = jax.random.split(key, 3)
    w1, b1 = _make_linear_bn(k1, in_features, out_features)
    w2, b2 = _make_linear_bn(k2, out_features, out_features)
    ref = dict(w1=w1, b1=b1, w2=w2, b2=b2)
    kp = dict(w2=w2.astype(matmul_dtype), b2=b2)
    if in_features != out_features:
        ws, bs = _make_linear_bn(k3, in_features, out_features)
        ref.update(ws=ws, bs=bs)
        # Fuse the two K=in_features matmuls (linear1 + shortcut) into one wide one.
        kp["wcat"] = jnp.concatenate([w1, ws], axis=1).astype(matmul_dtype)
        kp["bcat"] = jnp.concatenate([b1, bs], axis=1)
    else:
        kp["w1"] = w1.astype(matmul_dtype)
        kp["b1"] = b1
    return kp, ref


# ----------------------------- reference ---------------------------------- #

def residual_block_ref(x, p):
    identity = (x @ p["ws"] + p["bs"]) if "ws" in p else x
    h = jnp.maximum(x @ p["w1"] + p["b1"], 0.0)
    return jnp.maximum(h @ p["w2"] + p["b2"] + identity, 0.0)


# ------------------------------- demo -------------------------------------- #

if __name__ == "__main__":
    key = jax.random.PRNGKey(0)
    kx1, kp1, kx2, kp2 = jax.random.split(key, 4)

    # Case 1: projection shortcut (in != out), fused [w1|ws] matmul, bf16 MXU (default).
    B, IN_F, OUT_F = 512, 128, 256
    x1 = jax.random.normal(kx1, (B, IN_F), jnp.float32)
    kparams1, ref1_p = make_params(kp1, IN_F, OUT_F)                 # bf16 weights
    out1 = jax.block_until_ready(residual_block(x1, kparams1))
    ref1 = residual_block_ref(x1, ref1_p)
    assert out1.shape == (B, OUT_F)
    assert jnp.allclose(out1, ref1, atol=5e-2, rtol=5e-2), "proj-shortcut bf16 mismatch"

    # Case 2: identity shortcut (in == out) -> no shortcut matmul in the kernel.
    F2 = 256
    x2 = jax.random.normal(kx2, (B, F2), jnp.float32)
    kparams2, ref2_p = make_params(kp2, F2, F2)
    out2 = jax.block_until_ready(residual_block(x2, kparams2))
    ref2 = residual_block_ref(x2, ref2_p)
    assert out2.shape == (B, F2)
    assert jnp.allclose(out2, ref2, atol=5e-2, rtol=5e-2), "identity-shortcut bf16 mismatch"

    # Case 3: f32 matmul path (higher precision option).
    kparams3, ref3_p = make_params(kp1, IN_F, OUT_F, matmul_dtype=jnp.float32)
    out3 = jax.block_until_ready(residual_block(x1, kparams3))
    ref3 = residual_block_ref(x1, ref3_p)
    assert jnp.allclose(out3, ref3, atol=2e-2, rtol=2e-2), "f32 path mismatch"

    # Case 4: bf16 output dtype (mem-bound consumers), still f32 accumulation inside.
    out4 = jax.block_until_ready(residual_block(x1, kparams1, out_dtype=jnp.bfloat16))
    assert out4.dtype == jnp.bfloat16
    assert jnp.allclose(out4.astype(jnp.float32), ref1, atol=1e-1, rtol=1e-1), \
        "bf16-output path mismatch"

    print("KERNEL_OK")
</pallas_src>

<mosaic_0001>
module attributes {stable_mosaic.version = 11 : i64} {
  func.func @_rb_kernel_proj(%arg0: i32, %arg1: memref<128x128xf32, #tpu.memory_space<vmem>>, %arg2: memref<128x512xbf16, #tpu.memory_space<vmem>>, %arg3: memref<1x512xf32, #tpu.memory_space<vmem>>, %arg4: memref<256x256xbf16, #tpu.memory_space<vmem>>, %arg5: memref<1x256xf32, #tpu.memory_space<vmem>>, %arg6: memref<128x256xf32, #tpu.memory_space<vmem>>) attributes {dimension_semantics = [#tpu.dimension_semantics<parallel>], iteration_bounds = array<i64: 4>, scalar_prefetch = 0 : i64, scratch_operands = 0 : i64, tpu.core_type = #tpu.core_type<tc>, window_params = [{transform_indices = @transform_0, window_bounds = array<i64: 128, 128>}, {pipeline_mode = #tpu.pipeline_mode<synchronous>, transform_indices = @transform_1, window_bounds = array<i64: 128, 512>}, {pipeline_mode = #tpu.pipeline_mode<synchronous>, transform_indices = @transform_2, window_bounds = array<i64: 1, 512>}, {pipeline_mode = #tpu.pipeline_mode<synchronous>, transform_indices = @transform_3, window_bounds = array<i64: 256, 256>}, {pipeline_mode = #tpu.pipeline_mode<synchronous>, transform_indices = @transform_4, window_bounds = array<i64: 1, 256>}, {transform_indices = @transform_5, window_bounds = array<i64: 128, 256>}]} {
    %c0 = arith.constant 0 : index
    %c0_0 = arith.constant 0 : index
    %0 = vector.load %arg1[%c0, %c0_0] : memref<128x128xf32, #tpu.memory_space<vmem>>, vector<128x128xf32>
    %1 = arith.truncf %0 : vector<128x128xf32> to vector<128x128xbf16>
    %c0_1 = arith.constant 0 : index
    %c0_2 = arith.constant 0 : index
    %2 = vector.load %arg2[%c0_1, %c0_2] : memref<128x512xbf16, #tpu.memory_space<vmem>>, vector<128x512xbf16>
    %cst = arith.constant dense<0.000000e+00> : vector<128x512xf32>
    %3 = tpu.matmul %1, %2, %cst {dimension_numbers = #tpu.dot_dimension_numbers<[1], [0], [0], [1], [0, 0, 1, 1], [], []>} : vector<128x128xbf16>, vector<128x512xbf16>, vector<128x512xf32> -> vector<128x512xf32>
    %c0_3 = arith.constant 0 : index
    %c0_4 = arith.constant 0 : index
    %4 = vector.load %arg3[%c0_3, %c0_4] : memref<1x512xf32, #tpu.memory_space<vmem>>, vector<1x512xf32>
    %5 = vector.broadcast %4 : vector<1x512xf32> to vector<128x512xf32>
    %6 = arith.addf %3, %5 : vector<128x512xf32>
    %7 = vector.extract_strided_slice %6 {offsets = [0, 0], sizes = [128, 256], strides = [1, 1]} : vector<128x512xf32> to vector<128x256xf32>
    %cst_5 = arith.constant 0.000000e+00 : f32
    %8 = vector.broadcast %cst_5 : f32 to vector<128x256xf32>
    %9 = arith.maximumf %7, %8 : vector<128x256xf32>
    %10 = vector.extract_strided_slice %6 {offsets = [0, 256], sizes = [128, 256], strides = [1, 1]} : vector<128x512xf32> to vector<128x256xf32>
    %11 = arith.truncf %9 : vector<128x256xf32> to vector<128x256xbf16>
    %c0_6 = arith.constant 0 : index
    %c0_7 = arith.constant 0 : index
    %12 = vector.load %arg4[%c0_6, %c0_7] : memref<256x256xbf16, #tpu.memory_space<vmem>>, vector<256x256xbf16>
    %cst_8 = arith.constant dense<0.000000e+00> : vector<128x256xf32>
    %13 = tpu.matmul %11, %12, %cst_8 {dimension_numbers = #tpu.dot_dimension_numbers<[1], [0], [0], [1], [0, 0, 1, 1], [], []>} : vector<128x256xbf16>, vector<256x256xbf16>, vector<128x256xf32> -> vector<128x256xf32>
    %c0_9 = arith.constant 0 : index
    %c0_10 = arith.constant 0 : index
    %14 = vector.load %arg5[%c0_9, %c0_10] : memref<1x256xf32, #tpu.memory_space<vmem>>, vector<1x256xf32>
    %15 = vector.broadcast %14 : vector<1x256xf32> to vector<128x256xf32>
    %16 = arith.addf %13, %15 : vector<128x256xf32>
    %17 = arith.addf %16, %10 : vector<128x256xf32>
    %cst_11 = arith.constant 0.000000e+00 : f32
    %18 = vector.broadcast %cst_11 : f32 to vector<128x256xf32>
    %19 = arith.maximumf %17, %18 : vector<128x256xf32>
    %c0_12 = arith.constant 0 : index
    %c0_13 = arith.constant 0 : index
    %20 = vector.load %arg6[%c0_12, %c0_13] : memref<128x256xf32, #tpu.memory_space<vmem>>, vector<128x256xf32>
    tpu.vector_store %arg6[%c0_12, %c0_13], %19 {strides = array<i32>} : memref<128x256xf32, #tpu.memory_space<vmem>>, vector<128x256xf32>,
    return
  }
  func.func @transform_0(%arg0: i32) -> (i32, i32) {
    %c0_i32 = arith.constant 0 : i32
    %c0_i32_0 = arith.constant 0 : i32
    return %arg0, %c0_i32 : i32, i32
  }
  func.func @transform_1(%arg0: i32) -> (i32, i32) {
    %c0_i32 = arith.constant 0 : i32
    %c0_i32_0 = arith.constant 0 : i32
    %c0_i32_1 = arith.constant 0 : i32
    return %c0_i32, %c0_i32_0 : i32, i32
  }
  func.func @transform_2(%arg0: i32) -> (i32, i32) {
    %c0_i32 = arith.constant 0 : i32
    %c0_i32_0 = arith.constant 0 : i32
    %c0_i32_1 = arith.constant 0 : i32
    return %c0_i32, %c0_i32_0 : i32, i32
  }
  func.func @transform_3(%arg0: i32) -> (i32, i32) {
    %c0_i32 = arith.constant 0 : i32
    %c0_i32_0 = arith.constant 0 : i32
    %c0_i32_1 = arith.constant 0 : i32
    return %c0_i32, %c0_i32_0 : i32, i32
  }
  func.func @transform_4(%arg0: i32) -> (i32, i32) {
    %c0_i32 = arith.constant 0 : i32
    %c0_i32_0 = arith.constant 0 : i32
    %c0_i32_1 = arith.constant 0 : i32
    return %c0_i32, %c0_i32_0 : i32, i32
  }
  func.func @transform_5(%arg0: i32) -> (i32, i32) {
    %c0_i32 = arith.constant 0 : i32
    %c0_i32_0 = arith.constant 0 : i32
    return %arg0, %c0_i32 : i32, i32
  }
}

module attributes {stable_mosaic.version = 11 : i64} {
  func.func @_rb_kernel_proj(%arg0: i32, %arg1: memref<128x128xf32, #tpu.memory_space<vmem>>, %arg2: memref<128x512xbf16, #tpu.memory_space<vmem>>, %arg3: memref<1x512xf32, #tpu.memory_space<vmem>>, %arg4: memref<256x256xbf16, #tpu.memory_space<vmem>>, %arg5: memref<1x256xf32, #tpu.memory_space<vmem>>, %arg6: memref<128x256xf32, #tpu.memory_space<vmem>>) attributes {dimension_semantics = [#tpu.dimension_semantics<parallel>], iteration_bounds = array<i64: 4>, scalar_prefetch = 0 : i64, scratch_operands = 0 : i64, tpu.core_type = #tpu.core_type<tc>, window_params = [{transform_indices = @transform_0, window_bounds = array<i64: 128, 128>}, {pipeline_mode = #tpu.pipeline_mode<synchronous>, transform_indices = @transform_1, window_bounds = array<i64: 128, 512>}, {pipeline_mode = #tpu.pipeline_mode<synchronous>, transform_indices = @transform_2, window_bounds = array<i64: 1, 512>}, {pipeline_mode = #tpu.pipeline_mode<synchronous>, transform_indices = @transform_3, window_bounds = array<i64: 256, 256>}, {pipeline_mode = #tpu.pipeline_mode<synchronous>, transform_indices = @transform_4, window_bounds = array<i64: 1, 256>}, {transform_indices = @transform_5, window_bounds = array<i64: 128, 256>}]} {
    %c0 = arith.constant 0 : index
    %c0_0 = arith.constant 0 : index
    %0 = vector.load %arg1[%c0, %c0_0] : memref<128x128xf32, #tpu.memory_space<vmem>>, vector<128x128xf32>
    %1 = arith.truncf %0 : vector<128x128xf32> to vector<128x128xbf16>
    %c0_1 = arith.constant 0 : index
    %c0_2 = arith.constant 0 : index
    %2 = vector.load %arg2[%c0_1, %c0_2] : memref<128x512xbf16, #tpu.memory_space<vmem>>, vector<128x512xbf16>
    %cst = arith.constant dense<0.000000e+00> : vector<128x512xf32>
    %3 = tpu.matmul %1, %2, %cst {dimension_numbers = #tpu.dot_dimension_numbers<[1], [0], [0], [1], [0, 0, 1, 1], [], []>} : vector<128x128xbf16>, vector<128x512xbf16>, vector<128x512xf32> -> vector<128x512xf32>
    %c0_3 = arith.constant 0 : index
    %c0_4 = arith.constant 0 : index
    %4 = vector.load %arg3[%c0_3, %c0_4] : memref<1x512xf32, #tpu.memory_space<vmem>>, vector<1x512xf32>
    %5 = vector.broadcast %4 : vector<1x512xf32> to vector<128x512xf32>
    %6 = arith.addf %3, %5 : vector<128x512xf32>
    %7 = vector.extract_strided_slice %6 {offsets = [0, 0], sizes = [128, 256], strides = [1, 1]} : vector<128x512xf32> to vector<128x256xf32>
    %cst_5 = arith.constant 0.000000e+00 : f32
    %8 = vector.broadcast %cst_5 : f32 to vector<128x256xf32>
    %9 = arith.maximumf %7, %8 : vector<128x256xf32>
    %10 = vector.extract_strided_slice %6 {offsets = [0, 256], sizes = [128, 256], strides = [1, 1]} : vector<128x512xf32> to vector<128x256xf32>
    %11 = arith.truncf %9 : vector<128x256xf32> to vector<128x256xbf16>
    %c0_6 = arith.constant 0 : index
    %c0_7 = arith.constant 0 : index
    %12 = vector.load %arg4[%c0_6, %c0_7] : memref<256x256xbf16, #tpu.memory_space<vmem>>, vector<256x256xbf16>
    %cst_8 = arith.constant dense<0.000000e+00> : vector<128x256xf32>
    %13 = tpu.matmul %11, %12, %cst_8 {dimension_numbers = #tpu.dot_dimension_numbers<[1], [0], [0], [1], [0, 0, 1, 1], [], []>} : vector<128x256xbf16>, vector<256x256xbf16>, vector<128x256xf32> -> vector<128x256xf32>
    %c0_9 = arith.constant 0 : index
    %c0_10 = arith.constant 0 : index
    %14 = vector.load %arg5[%c0_9, %c0_10] : memref<1x256xf32, #tpu.memory_space<vmem>>, vector<1x256xf32>
    %15 = vector.broadcast %14 : vector<1x256xf32> to vector<128x256xf32>
    %16 = arith.addf %13, %15 : vector<128x256xf32>
    %17 = arith.addf %16, %10 : vector<128x256xf32>
    %cst_11 = arith.constant 0.000000e+00 : f32
    %18 = vector.broadcast %cst_11 : f32 to vector<128x256xf32>
    %19 = arith.maximumf %17, %18 : vector<128x256xf32>
    %c0_12 = arith.constant 0 : index
    %c0_13 = arith.constant 0 : index
    %20 = vector.load %arg6[%c0_12, %c0_13] : memref<128x256xf32, #tpu.memory_space<vmem>>, vector<128x256xf32>
    tpu.vector_store %arg6[%c0_12, %c0_13], %19 {strides = array<i32>} : memref<128x256xf32, #tpu.memory_space<vmem>>, vector<128x256xf32>,
    return
  }
  func.func @transform_0(%arg0: i32) -> (i32, i32) {
    %c0_i32 = arith.constant 0 : i32
    %c0_i32_0 = arith.constant 0 : i32
    return %arg0, %c0_i32 : i32, i32
  }
  func.func @transform_1(%arg0: i32) -> (i32, i32) {
    %c0_i32 = arith.constant 0 : i32
    %c0_i32_0 = arith.constant 0 : i32
    %c0_i32_1 = arith.constant 0 : i32
    return %c0_i32, %c0_i32_0 : i32, i32
  }
  func.func @transform_2(%arg0: i32) -> (i32, i32) {
    %c0_i32 = arith.constant 0 : i32
    %c0_i32_0 = arith.constant 0 : i32
    %c0_i32_1 = arith.constant 0 : i32
    return %c0_i32, %c0_i32_0 : i32, i32
  }
  func.func @transform_3(%arg0: i32) -> (i32, i32) {
    %c0_i32 = arith.constant 0 : i32
    %c0_i32_0 = arith.constant 0 : i32
    %c0_i32_1 = arith.constant 0 : i32
    return %c0_i32, %c0_i32_0 : i32, i32
  }
  func.func @transform_4(%arg0: i32) -> (i32, i32) {
    %c0_i32 = arith.constant 0 : i32
    %c0_i32_0 = arith.constant 0 : i32
    %c0_i32_1 = arith.constant 0 : i32
    return %c0_i32, %c0_i32_0 : i32, i32
  }
  func.func @transform_5(%arg0: i32) -> (i32, i32) {
    %c0_i32 = arith.constant 0 : i32
    %c0_i32_0 = arith.constant 0 : i32
    return %arg0, %c0_i32 : i32, i32
  }
}

</mosaic_0001>

<llo_original>
// kernel: tpu_custom_call.1
$region0: #{tpu_custom_call.1}
  #allocation0 [shape = 'u32[]', space=smem, size = 0x4, offset = 0x4, fixed_abs, tag = 'smem constant byte address 0x4 - core index']
  #allocation1 [shape = 'u32[72,128]{1,0:T(1,128)}', space=vmem, size = 0x9000, scoped, tag = 'internal scratch']
  %s0 = inlined_call_operand.hbm [shape: f32[512,128], index: 0, kind: input, shape index: {}]
  %s1 = inlined_call_operand.hbm [shape: bf16[128,512], index: 1, kind: input, shape index: {}]
  %s2 = inlined_call_operand.hbm [shape: f32[1,512], index: 2, kind: input, shape index: {}]
  %s3 = inlined_call_operand.hbm [shape: bf16[256,256], index: 3, kind: input, shape index: {}]
  %s4 = inlined_call_operand.vmem [shape: f32[1,256], index: 4, kind: input, shape index: {}]
  %s5 = inlined_call_operand.hbm [shape: f32[512,256], index: 5, kind: output, shape index: {}]
  %s6 = sld [smem:[#allocation0]]
  $region69: #{tpu_custom_call.1} parent=0
    _
  %s8 = ssub.s32 1, %s6
  %s9 = scalar_select 0, %s8, %s6
  $region1: #{tpu_custom_call.1} parent=0
    #allocation2 [shape = 'u8[131072]{0}', space=vmem, size = 0x20000, scoped, tag = 'input window, operand 0']
    #allocation3 [shape = 's32[2]{0}', space=sflag, size = 0x8, scoped, tag = 'scoped memory for tpu_custom_call.1']
    #allocation4 [shape = 's32[2]{0}', space=sflag, size = 0x8, scoped, tag = 'scoped memory for tpu_custom_call.1']
    #allocation5 [shape = 'u8[131072]{0}', space=vmem, size = 0x20000, scoped, tag = 'input window, operand 1, single buffered']
    #allocation6 [shape = 's32[1]{0}', space=sflag, size = 0x4, scoped, tag = 'scoped memory for tpu_custom_call.1']
    #allocation7 [shape = 'u8[2048]{0}', space=vmem, size = 0x800, scoped, tag = 'input window, operand 2, single buffered']
    #allocation8 [shape = 'u8[131072]{0}', space=vmem, size = 0x20000, scoped, tag = 'input window, operand 3, single buffered']
    #allocation9 [shape = 's32[1]{0}', space=sflag, size = 0x4, scoped, tag = 'scoped memory for tpu_custom_call.1']
    #allocation10 [shape = 'u8[262144]{0}', space=vmem, size = 0x40000, scoped, tag = 'output window, operand 0']
    %10 = vsyncpa [#allocation3], 0
    %s11 = scalar_lea.sflag [#allocation3], 1
    %12 = vsyncpa %s11, 0
    %13 = vsyncpa [#allocation6], 0
    %14 = vsyncpa [#allocation9], 0
    %15 = vsyncpa [#allocation4], 0
    %s16 = scalar_lea.sflag [#allocation4], 1
    %17 = vsyncpa %s16, 0
    loop: start=0, step=1, limit=6
    $region2: #{tpu_custom_call.1} parent=1 // loop_pre_header
      _
    $region3: #{tpu_custom_call.1} parent=1 // loop_header
      %s19 = sphi 0, %s23
      %p20 = scmp.ge.s32.totalorder %s19, 6
      %s29 = sphi 0, %s31
      %s32 = sphi 0, %s29
      %s33 = sphi 0, %s32
      %s49 = sphi 0, %s33
      %s53 = sphi 0, %s53
      %s55 = sphi 0, %s53
      %s56 = sphi 0, %s55
      %s70 = sphi 0, %s56
      %s74 = sphi 0, %s74
      %s76 = sphi 0, %s74
      %s77 = sphi 0, %s76
      %s91 = sphi 0, %s77
      %s95 = sphi 0, %s95
      %s97 = sphi 0, %s95
      %s98 = sphi 0, %s97
      %s112 = sphi 0, %s98
      %s116 = sphi 0, %s116
      %s118 = sphi 0, %s116
      %s119 = sphi 0, %s118
      %s133 = sphi 0, %s119
      %s139 = sphi 0, %s141
      %s142 = sphi 0, %s139
      %s143 = sphi 0, %s142
      %s159 = sphi 0, %s143
    $region4: #{tpu_custom_call.1} parent=1 // loop_header_branch
      %22 = sbr.rel (%p20) target = $region8
    $region5: #{tpu_custom_call.1} parent=1 // loop_body
      %s24 = ssub.s32 %s19, 1
      %s25 = ssub.s32 %s19, 2
      %s26 = sadd.s32 %s19, 1
      %s27 = ssub.s32 %s19, %s26
      %p28 = scmp.eq.s32.totalorder %s27, 0
      %s30 = sadd.s32 %s29, 1
      %s31 = scalar_select %p28, %s29, %s30
      %p34 = pneg %p28
      %p35 = scmp.eq.s32.totalorder %s19, 3
      %p36 = por %p34, %p35
      %p37 = scmp.ne.s32.totalorder %s29, %s32
      %p38 = scmp.eq.s32.totalorder %s19, 0
      %p39 = por %p37, %p38
      %p40 = scmp.ne.s32.totalorder %s29, %s32
      %p41 = scmp.eq.s32.totalorder %s24, 3
      %p42 = por %p40, %p41
      %p43 = scmp.ne.s32.totalorder %s32, %s33
      %p44 = scmp.eq.s32.totalorder %s24, 0
      %p45 = por %p43, %p44
      %p46 = scmp.ne.s32.totalorder %s32, %s33
      %p47 = scmp.eq.s32.totalorder %s25, 3
      %p48 = por %p46, %p47
      %p50 = scmp.ne.s32.totalorder %s33, %s49
      %p51 = scmp.eq.s32.totalorder %s25, 0
      %p52 = por %p50, %p51
      %s54 = sadd.s32 %s53, 1
      %p57 = scmp.eq.s32.totalorder %s19, 3
      %p58 = scmp.ne.s32.totalorder %s53, %s55
      %p59 = scmp.eq.s32.totalorder %s19, 0
      %p60 = por %p58, %p59
      %p61 = scmp.ne.s32.totalorder %s53, %s55
      %p62 = scmp.eq.s32.totalorder %s24, 3
      %p63 = por %p61, %p62
      %p64 = scmp.ne.s32.totalorder %s55, %s56
      %p65 = scmp.eq.s32.totalorder %s24, 0
      %p66 = por %p64, %p65
      %p67 = scmp.ne.s32.totalorder %s55, %s56
      %p68 = scmp.eq.s32.totalorder %s25, 3
      %p69 = por %p67, %p68
      %p71 = scmp.ne.s32.totalorder %s56, %s70
      %p72 = scmp.eq.s32.totalorder %s25, 0
      %p73 = por %p71, %p72
      %s75 = sadd.s32 %s74, 1
      %p78 = scmp.eq.s32.totalorder %s19, 3
      %p79 = scmp.ne.s32.totalorder %s74, %s76
      %p80 = scmp.eq.s32.totalorder %s19, 0
      %p81 = por %p79, %p80
      %p82 = scmp.ne.s32.totalorder %s74, %s76
      %p83 = scmp.eq.s32.totalorder %s24, 3
      %p84 = por %p82, %p83
      %p85 = scmp.ne.s32.totalorder %s76, %s77
      %p86 = scmp.eq.s32.totalorder %s24, 0
      %p87 = por %p85, %p86
      %p88 = scmp.ne.s32.totalorder %s76, %s77
      %p89 = scmp.eq.s32.totalorder %s25, 3
      %p90 = por %p88, %p89
      %p92 = scmp.ne.s32.totalorder %s77, %s91
      %p93 = scmp.eq.s32.totalorder %s25, 0
      %p94 = por %p92, %p93
      %s96 = sadd.s32 %s95, 1
      %p99 = scmp.eq.s32.totalorder %s19, 3
      %p100 = scmp.ne.s32.totalorder %s95, %s97
      %p101 = scmp.eq.s32.totalorder %s19, 0
      %p102 = por %p100, %p101
      %p103 = scmp.ne.s32.totalorder %s95, %s97
      %p104 = scmp.eq.s32.totalorder %s24, 3
      %p105 = por %p103, %p104
      %p106 = scmp.ne.s32.totalorder %s97, %s98
      %p107 = scmp.eq.s32.totalorder %s24, 0
      %p108 = por %p106, %p107
      %p109 = scmp.ne.s32.totalorder %s97, %s98
      %p110 = scmp.eq.s32.totalorder %s25, 3
      %p111 = por %p109, %p110
      %p113 = scmp.ne.s32.totalorder %s98, %s112
      %p114 = scmp.eq.s32.totalorder %s25, 0
      %p115 = por %p113, %p114
      %s117 = sadd.s32 %s116, 1
      %p120 = scmp.eq.s32.totalorder %s19, 3
      %p121 = scmp.ne.s32.totalorder %s116, %s118
      %p122 = scmp.eq.s32.totalorder %s19, 0
      %p123 = por %p121, %p122
      %p124 = scmp.ne.s32.totalorder %s116, %s118
      %p125 = scmp.eq.s32.totalorder %s24, 3
      %p126 = por %p124, %p125
      %p127 = scmp.ne.s32.totalorder %s118, %s119
      %p128 = scmp.eq.s32.totalorder %s24, 0
      %p129 = por %p127, %p128
      %p130 = scmp.ne.s32.totalorder %s118, %s119
      %p131 = scmp.eq.s32.totalorder %s25, 3
      %p132 = por %p130, %p131
      %p134 = scmp.ne.s32.totalorder %s119, %s133
      %p135 = scmp.eq.s32.totalorder %s25, 0
      %p136 = por %p134, %p135
      %s137 = ssub.s32 %s19, %s26
      %p138 = scmp.eq.s32.totalorder %s137, 0
      %s140 = sadd.s32 %s139, 1
      %s141 = scalar_select %p138, %s139, %s140
      %p144 = pneg %p138
      %p145 = scmp.eq.s32.totalorder %s19, 3
      %p146 = por %p144, %p145
      %p147 = scmp.ne.s32.totalorder %s139, %s142
      %p148 = scmp.eq.s32.totalorder %s19, 0
      %p149 = por %p147, %p148
      %p150 = scmp.ne.s32.totalorder %s139, %s142
      %p151 = scmp.eq.s32.totalorder %s24, 3
      %p152 = por %p150, %p151
      %p153 = scmp.ne.s32.totalorder %s142, %s143
      %p154 = scmp.eq.s32.totalorder %s24, 0
      %p155 = por %p153, %p154
      %p156 = scmp.ne.s32.totalorder %s142, %s143
      %p157 = scmp.eq.s32.totalorder %s25, 3
      %p158 = por %p156, %p157
      %p160 = scmp.ne.s32.totalorder %s143, %s159
      %p161 = scmp.eq.s32.totalorder %s25, 0
      %p162 = por %p160, %p161
      %p163 = scmp.le.s32.totalorder 1, %s19
      %p164 = scmp.lt.s32.totalorder %s19, 5
      %p165 = pnand %p163, %p164
      %p166 = pneg %p165
      // Predicated region
      $region9: #{tpu_custom_call.1} parent=5 // pred_check
        _
      $region10: #{tpu_custom_call.1} parent=5 // pred_check_branch
        %168 = sbr.rel (%p165) target = $region12
      $region11: #{tpu_custom_call.1} parent=5 // pred_region
        %s169 = ssub.s32 %s19, 1
        // Predicated region
        $region13: #{tpu_custom_call.1} parent=11 // pred_check
          %p170 = pneg %p66
        $region14: #{tpu_custom_call.1} parent=11 // pred_check_branch
          %172 = sbr.rel (%p170) target = $region16
        $region15: #{tpu_custom_call.1} parent=11 // pred_region
          %174 = vsyncadd [#allocation6], 0
          %s175 = sshll.u32 %s1, 4
          %s176 = int_to_ptr.hbm [resolvable:$true] %s175
          %s177 = sshll.u32 [#allocation5], 4
          %s178 = int_to_ptr.vmem [resolvable:$true] %s177
          %183 = dma.hbm_to_vmem [thread:$0]  %s176, 4096, %s178, [#allocation6], 256, 256, 16
        $region16: #{tpu_custom_call.1} parent=11 // pred_fallthru
          _
        // Predicated region
        $region17: #{tpu_custom_call.1} parent=11 // pred_check
          %p184 = pneg %p87
        $region18: #{tpu_custom_call.1} parent=11 // pred_check_branch
          %186 = sbr.rel (%p184) target = $region20
        $region19: #{tpu_custom_call.1} parent=11 // pred_region
          %188 = vsyncadd [#allocation6], 0
          %s190 = sshll.u32 %s2, 4
          %s191 = int_to_ptr.hbm [resolvable:$true] %s190
          %s192 = sshll.u32 [#allocation7], 4
          %s193 = int_to_ptr.vmem [resolvable:$true] %s192
          %195 = dma.hbm_to_vmem [thread:$0]  %s191, 64, %s193, [#allocation6]
        $region20: #{tpu_custom_call.1} parent=11 // pred_fallthru
          _
        // Predicated region
        $region21: #{tpu_custom_call.1} parent=11 // pred_check
          %p196 = pneg %p108
        $region22: #{tpu_custom_call.1} parent=11 // pred_check_branch
          %198 = sbr.rel (%p196) target = $region24
        $region23: #{tpu_custom_call.1} parent=11 // pred_region
          %200 = vsyncadd [#allocation9], 0
          %s201 = sshll.u32 %s3, 4
          %s202 = int_to_ptr.hbm [resolvable:$true] %s201
          %s203 = sshll.u32 [#allocation8], 4
          %s204 = int_to_ptr.vmem [resolvable:$true] %s203
          %209 = dma.hbm_to_vmem [thread:$0]  %s202, 4096, %s204, [#allocation9], 128, 128, 8
        $region24: #{tpu_custom_call.1} parent=11 // pred_fallthru
          _
        // Predicated region
        $region25: #{tpu_custom_call.1} parent=11 // pred_check
          %p210 = pneg %p129
        $region26: #{tpu_custom_call.1} parent=11 // pred_check_branch
          %212 = sbr.rel (%p210) target = $region28
        $region27: #{tpu_custom_call.1} parent=11 // pred_region
          _
        $region28: #{tpu_custom_call.1} parent=11 // pred_fallthru
          _
      $region12: #{tpu_custom_call.1} parent=5 // pred_fallthru
        _
      %p213 = scmp.lt.s32.totalorder %s19, 4
      // Predicated region
      $region29: #{tpu_custom_call.1} parent=5 // pred_check
        %p214 = pneg %p213
      $region30: #{tpu_custom_call.1} parent=5 // pred_check_branch
        %216 = sbr.rel (%p214) target = $region32
      $region31: #{tpu_custom_call.1} parent=5 // pred_region
        // Predicated region
        $region33: #{tpu_custom_call.1} parent=31 // pred_check
          %p217 = pneg %p39
        $region34: #{tpu_custom_call.1} parent=31 // pred_check_branch
          %219 = sbr.rel (%p217) target = $region36
        $region35: #{tpu_custom_call.1} parent=31 // pred_region
          %s220 = sand.u32 %s29, 1
          %s221 = scalar_lea.sflag [#allocation3], %s220
          %s222 = sand.u32 %s29, 1
          %s223 = smul.addr %s222, 128
          %s224 = scalar_lea.vmem [#allocation2], %s223
          %s225 = smul.u32 16, %s19
          %227 = vsyncadd %s221, 0
          %s228 = smul.addr %s225, 8
          %s229 = scalar_lea.hbm %s0, %s228
          %s230 = sshll.u32 %s229, 4
          %s231 = int_to_ptr.hbm [resolvable:$true] %s230
          %s232 = sshll.u32 %s224, 4
          %s233 = int_to_ptr.vmem [resolvable:$true] %s232
          %238 = dma.hbm_to_vmem [thread:$0]  %s231, 2048, %s233, %s221, 128, 128, 8
        $region36: #{tpu_custom_call.1} parent=31 // pred_fallthru
          _
      $region32: #{tpu_custom_call.1} parent=5 // pred_fallthru
        _
      %p239 = scmp.le.s32.totalorder 1, %s19
      %p240 = scmp.lt.s32.totalorder %s19, 5
      %p241 = pnand %p239, %p240
      %p242 = pneg %p241
      // Predicated region
      $region37: #{tpu_custom_call.1} parent=5 // pred_check
        _
      $region38: #{tpu_custom_call.1} parent=5 // pred_check_branch
        %244 = sbr.rel (%p241) target = $region40
      $region39: #{tpu_custom_call.1} parent=5 // pred_region
        %s245 = ssub.s32 %s19, 1
        %s246 = sand.u32 %s32, 1
        %s247 = scalar_lea.sflag [#allocation3], %s246
        %s248 = sand.u32 %s32, 1
        %s249 = smul.addr %s248, 128
        %s250 = scalar_lea.vmem [#allocation2], %s249
        // Predicated region
        $region41: #{tpu_custom_call.1} parent=39 // pred_check
          %p251 = pneg %p45
        $region42: #{tpu_custom_call.1} parent=39 // pred_check_branch
          %253 = sbr.rel (%p251) target = $region44
        $region43: #{tpu_custom_call.1} parent=39 // pred_region
          %255 = dma.done %s247, 2048
        $region44: #{tpu_custom_call.1} parent=39 // pred_fallthru
          _
        // Predicated region
        $region45: #{tpu_custom_call.1} parent=39 // pred_check
          %p256 = pneg %p66
        $region46: #{tpu_custom_call.1} parent=39 // pred_check_branch
          %258 = sbr.rel (%p256) target = $region48
        $region47: #{tpu_custom_call.1} parent=39 // pred_region
          %260 = dma.done [#allocation6], 4096
        $region48: #{tpu_custom_call.1} parent=39 // pred_fallthru
          _
        // Predicated region
        $region49: #{tpu_custom_call.1} parent=39 // pred_check
          %p261 = pneg %p87
        $region50: #{tpu_custom_call.1} parent=39 // pred_check_branch
          %263 = sbr.rel (%p261) target = $region52
        $region51: #{tpu_custom_call.1} parent=39 // pred_region
          %265 = dma.done [#allocation6], 64
        $region52: #{tpu_custom_call.1} parent=39 // pred_fallthru
          _
        // Predicated region
        $region53: #{tpu_custom_call.1} parent=39 // pred_check
          %p266 = pneg %p108
        $region54: #{tpu_custom_call.1} parent=39 // pred_check_branch
          %268 = sbr.rel (%p266) target = $region56
        $region55: #{tpu_custom_call.1} parent=39 // pred_region
          %270 = dma.done [#allocation9], 4096
        $region56: #{tpu_custom_call.1} parent=39 // pred_fallthru
          _
        %s271 = sand.u32 %s32, 1
        %s272 = scalar_lea.sflag [#allocation3], %s271
        %s273 = sand.u32 %s32, 1
        %s274 = smul.addr %s273, 128
        %s275 = scalar_lea.vmem [#allocation2], %s274
        %p276 = pneg %p45
        %p277 = pneg %p42
        %p278 = pneg %p66
        %p279 = pneg %p63
        %p280 = pneg %p87
        %p281 = pneg %p84
        %p282 = pneg %p108
        %p283 = pneg %p105
        %p284 = pneg %p129
        %p285 = pneg %p126
        %p286 = pneg %p155
        %p287 = pneg %p152
        %s288 = sand.u32 %s142, 1
        %s289 = scalar_lea.sflag [#allocation4], %s288
        %s290 = sand.u32 %s142, 1
        %s291 = smul.addr %s290, 256
        %s292 = scalar_lea.vmem [#allocation10], %s291
        %s293 = smul.u32 16, %s24
        %s294 = smul.u32 16, %s24
        %v295 = vld [vmem:[%s250] sm:$0xff]
        %v296 = vld [vmem:[%s250 + $0x8] sm:$0xff]
        %v297 = vld [vmem:[%s250 + $0x10] sm:$0xff]
        %v298 = vld [vmem:[%s250 + $0x18] sm:$0xff]
        %v299 = vld [vmem:[%s250 + $0x20] sm:$0xff]
        %v300 = vld [vmem:[%s250 + $0x28] sm:$0xff]
        %v301 = vld [vmem:[%s250 + $0x30] sm:$0xff]
        %v302 = vld [vmem:[%s250 + $0x38] sm:$0xff]
        %v303 = vld [vmem:[%s250 + $0x40] sm:$0xff]
        %v304 = vld [vmem:[%s250 + $0x48] sm:$0xff]
        %v305 = vld [vmem:[%s250 + $0x50] sm:$0xff]
        %v306 = vld [vmem:[%s250 + $0x58] sm:$0xff]
        %v307 = vld [vmem:[%s250 + $0x60] sm:$0xff]
        %v308 = vld [vmem:[%s250 + $0x68] sm:$0xff]
        %v309 = vld [vmem:[%s250 + $0x70] sm:$0xff]
        %v310 = vld [vmem:[%s250 + $0x78] sm:$0xff]
        %v311 = vpack.c.bf16 %v296, %v295
        %v312 = vpack.c.bf16 %v298, %v297
        %v313 = vpack.c.bf16 %v300, %v299
        %v314 = vpack.c.bf16 %v302, %v301
        %v315 = vpack.c.bf16 %v304, %v303
        %v316 = vpack.c.bf16 %v306, %v305
        %v317 = vpack.c.bf16 %v308, %v307
        %v318 = vpack.c.bf16 %v310, %v309
        %v319 = vld [vmem:[#allocation5] sm:$0xff]
        %v320 = vld [vmem:[#allocation5 + $0x8] sm:$0xff]
        %v321 = vld [vmem:[#allocation5 + $0x10] sm:$0xff]
        %v322 = vld [vmem:[#allocation5 + $0x18] sm:$0xff]
        %v323 = vld [vmem:[#allocation5 + $0x20] sm:$0xff]
        %v324 = vld [vmem:[#allocation5 + $0x28] sm:$0xff]
        %v325 = vld [vmem:[#allocation5 + $0x30] sm:$0xff]
        %v326 = vld [vmem:[#allocation5 + $0x38] sm:$0xff]
        %v327 = vld [vmem:[#allocation5 + $0x40] sm:$0xff]
        %v328 = vld [vmem:[#allocation5 + $0x48] sm:$0xff]
        %v329 = vld [vmem:[#allocation5 + $0x50] sm:$0xff]
        %v330 = vld [vmem:[#allocation5 + $0x58] sm:$0xff]
        %v331 = vld [vmem:[#allocation5 + $0x60] sm:$0xff]
        %v332 = vld [vmem:[#allocation5 + $0x68] sm:$0xff]
        %v333 = vld [vmem:[#allocation5 + $0x70] sm:$0xff]
        %v334 = vld [vmem:[#allocation5 + $0x78] sm:$0xff]
        %v335 = vld [vmem:[#allocation5 + $0x80] sm:$0xff]
        %v336 = vld [vmem:[#allocation5 + $0x88] sm:$0xff]
        %v337 = vld [vmem:[#allocation5 + $0x90] sm:$0xff]
        %v338 = vld [vmem:[#allocation5 + $0x98] sm:$0xff]
        %v339 = vld [vmem:[#allocation5 + $0xa0] sm:$0xff]
        %v340 = vld [vmem:[#allocation5 + $0xa8] sm:$0xff]
        %v341 = vld [vmem:[#allocation5 + $0xb0] sm:$0xff]
        %v342 = vld [vmem:[#allocation5 + $0xb8] sm:$0xff]
        %v343 = vld [vmem:[#allocation5 + $0xc0] sm:$0xff]
        %v344 = vld [vmem:[#allocation5 + $0xc8] sm:$0xff]
        %v345 = vld [vmem:[#allocation5 + $0xd0] sm:$0xff]
        %v346 = vld [vmem:[#allocation5 + $0xd8] sm:$0xff]
        %v347 = vld [vmem:[#allocation5 + $0xe0] sm:$0xff]
        %v348 = vld [vmem:[#allocation5 + $0xe8] sm:$0xff]
        %v349 = vld [vmem:[#allocation5 + $0xf0] sm:$0xff]
        %v350 = vld [vmem:[#allocation5 + $0xf8] sm:$0xff]
        %v351 = vld [vmem:[#allocation7] sm:$0xf]
        %v353 = vperm.slane %v351, 0
        %v354 = vperm.slane %v351, 1
        %v355 = vperm.slane %v351, 2
        %v356 = vperm.slane %v351, 3
        %v393 = vunpack.c.l.b16 %v319
        %v394 = vunpack.c.h.b16 %v319
        %v395 = vunpack.c.l.b16 %v320
        %v396 = vunpack.c.h.b16 %v320
        %v397 = vunpack.c.l.b16 %v321
        %v398 = vunpack.c.h.b16 %v321
        %v399 = vunpack.c.l.b16 %v322
        %v400 = vunpack.c.h.b16 %v322
        %v401 = vunpack.c.l.b16 %v323
        %v402 = vunpack.c.h.b16 %v323
        %v403 = vunpack.c.l.b16 %v324
        %v404 = vunpack.c.h.b16 %v324
        %v405 = vunpack.c.l.b16 %v325
        %v406 = vunpack.c.h.b16 %v325
        %v407 = vunpack.c.l.b16 %v326
        %v408 = vunpack.c.h.b16 %v326
        %v409 = vunpack.c.l.b16 %v327
        %v410 = vunpack.c.h.b16 %v327
        %v411 = vunpack.c.l.b16 %v328
        %v412 = vunpack.c.h.b16 %v328
        %v413 = vunpack.c.l.b16 %v329
        %v414 = vunpack.c.h.b16 %v329
        %v415 = vunpack.c.l.b16 %v330
        %v416 = vunpack.c.h.b16 %v330
        %v417 = vunpack.c.l.b16 %v331
        %v418 = vunpack.c.h.b16 %v331
        %v419 = vunpack.c.l.b16 %v332
        %v420 = vunpack.c.h.b16 %v332
        %v421 = vunpack.c.l.b16 %v333
        %v422 = vunpack.c.h.b16 %v333
        %v423 = vunpack.c.l.b16 %v334
        %v424 = vunpack.c.h.b16 %v334
        %v425 = vunpack.c.l.b16 %v335
        %v426 = vunpack.c.h.b16 %v335
        %v427 = vunpack.c.l.b16 %v336
        %v428 = vunpack.c.h.b16 %v336
        %v429 = vunpack.c.l.b16 %v337
        %v430 = vunpack.c.h.b16 %v337
        %v431 = vunpack.c.l.b16 %v338
        %v432 = vunpack.c.h.b16 %v338
        %v433 = vunpack.c.l.b16 %v339
        %v434 = vunpack.c.h.b16 %v339
        %v435 = vunpack.c.l.b16 %v340
        %v436 = vunpack.c.h.b16 %v340
        %v437 = vunpack.c.l.b16 %v341
        %v438 = vunpack.c.h.b16 %v341
        %v439 = vunpack.c.l.b16 %v342
        %v440 = vunpack.c.h.b16 %v342
        %v441 = vunpack.c.l.b16 %v343
        %v442 = vunpack.c.h.b16 %v343
        %v443 = vunpack.c.l.b16 %v344
        %v444 = vunpack.c.h.b16 %v344
        %v445 = vunpack.c.l.b16 %v345
        %v446 = vunpack.c.h.b16 %v345
        %v447 = vunpack.c.l.b16 %v346
        %v448 = vunpack.c.h.b16 %v346
        %v449 = vunpack.c.l.b16 %v347
        %v450 = vunpack.c.h.b16 %v347
        %v451 = vunpack.c.l.b16 %v348
        %v452 = vunpack.c.h.b16 %v348
        %v453 = vunpack.c.l.b16 %v349
        %v454 = vunpack.c.h.b16 %v349
        %v455 = vunpack.c.l.b16 %v350
        %v456 = vunpack.c.h.b16 %v350
        %v457 = vpack.c.b16 %v397, %v393
        %v458 = vpack.c.b16 %v398, %v394
        %v459 = vpack.c.b16 %v399, %v395
        %v460 = vpack.c.b16 %v400, %v396
        %v461 = vpack.c.b16 %v405, %v401
        %v462 = vpack.c.b16 %v406, %v402
        %v463 = vpack.c.b16 %v407, %v403
        %v464 = vpack.c.b16 %v408, %v404
        %v465 = vpack.c.b16 %v413, %v409
        %v466 = vpack.c.b16 %v414, %v410
        %v467 = vpack.c.b16 %v415, %v411
        %v468 = vpack.c.b16 %v416, %v412
        %v469 = vpack.c.b16 %v421, %v417
        %v470 = vpack.c.b16 %v422, %v418
        %v471 = vpack.c.b16 %v423, %v419
        %v472 = vpack.c.b16 %v424, %v420
        %v473 = vpack.c.b16 %v429, %v425
        %v474 = vpack.c.b16 %v430, %v426
        %v475 = vpack.c.b16 %v431, %v427
        %v476 = vpack.c.b16 %v432, %v428
        %v477 = vpack.c.b16 %v437, %v433
        %v478 = vpack.c.b16 %v438, %v434
        %v479 = vpack.c.b16 %v439, %v435
        %v480 = vpack.c.b16 %v440, %v436
        %v481 = vpack.c.b16 %v445, %v441
        %v482 = vpack.c.b16 %v446, %v442
        %v483 = vpack.c.b16 %v447, %v443
        %v484 = vpack.c.b16 %v448, %v444
        %v485 = vpack.c.b16 %v453, %v449
        %v486 = vpack.c.b16 %v454, %v450
        %v487 = vpack.c.b16 %v455, %v451
        %v488 = vpack.c.b16 %v456, %v452
        %521 = vmatpush.bf16.msra.mxu0 %v485
        %522 = vmatpush.bf16.msra.mxu0 %v481
        %523 = vmatpush.bf16.msra.mxu0 %v477
        %524 = vmatpush.bf16.msra.mxu0 %v473
        %525 = vmatpush.bf16.msra.mxu0 %v469
        %526 = vmatpush.bf16.msra.mxu0 %v465
        %527 = vmatpush.bf16.msra.mxu0 %v461
        %528 = vmatpush.bf16.msra.mxu0 %v457
        %529 = vmatmul.bf16.gmra.mxu0 %v311
        %v530 = vpop.f32.mrf.mxu0
        %v531 = vadd.f32 %v353, %v530
        %v532 = vpop.f32.mrf.mxu0
        %v533 = vadd.f32 %v353, %v532
        %534 = vmatmul.bf16.gmra.mxu0 %v312
        %v535 = vpop.f32.mrf.mxu0
        %v536 = vadd.f32 %v353, %v535
        %v537 = vpop.f32.mrf.mxu0
        %v538 = vadd.f32 %v353, %v537
        %539 = vmatmul.bf16.gmra.mxu0 %v313
        %v540 = vpop.f32.mrf.mxu0
        %v541 = vadd.f32 %v353, %v540
        %v542 = vpop.f32.mrf.mxu0
        %v543 = vadd.f32 %v353, %v542
        %544 = vmatmul.bf16.gmra.mxu0 %v314
        %v545 = vpop.f32.mrf.mxu0
        %v546 = vadd.f32 %v353, %v545
        %v547 = vpop.f32.mrf.mxu0
        %v548 = vadd.f32 %v353, %v547
        %549 = vmatmul.bf16.gmra.mxu0 %v315
        %v550 = vpop.f32.mrf.mxu0
        %v551 = vadd.f32 %v353, %v550
        %v552 = vpop.f32.mrf.mxu0
        %v553 = vadd.f32 %v353, %v552
        %554 = vmatmul.bf16.gmra.mxu0 %v316
        %v555 = vpop.f32.mrf.mxu0
        %v556 = vadd.f32 %v353, %v555
        %v557 = vpop.f32.mrf.mxu0
        %v558 = vadd.f32 %v353, %v557
        %559 = vmatmul.bf16.gmra.mxu0 %v317
        %v560 = vpop.f32.mrf.mxu0
        %v561 = vadd.f32 %v353, %v560
        %v562 = vpop.f32.mrf.mxu0
        %v563 = vadd.f32 %v353, %v562
        %564 = vmatmul.bf16.gmra.mxu0 %v318
        %v565 = vpop.f32.mrf.mxu0
        %v566 = vadd.f32 %v353, %v565
        %v567 = vpop.f32.mrf.mxu0
        %v568 = vadd.f32 %v353, %v567
        %569 = vdwg.mxu0
        %570 = vmatpush.bf16.msra.mxu0 %v486
        %571 = vmatpush.bf16.msra.mxu0 %v482
        %572 = vmatpush.bf16.msra.mxu0 %v478
        %573 = vmatpush.bf16.msra.mxu0 %v474
        %574 = vmatpush.bf16.msra.mxu0 %v470
        %575 = vmatpush.bf16.msra.mxu0 %v466
        %576 = vmatpush.bf16.msra.mxu0 %v462
        %577 = vmatpush.bf16.msra.mxu0 %v458
        %578 = vmatmul.bf16.gmra.mxu0 %v311
        %v579 = vpop.f32.mrf.mxu0
        %v580 = vadd.f32 %v354, %v579
        %v581 = vpop.f32.mrf.mxu0
        %v582 = vadd.f32 %v354, %v581
        %583 = vmatmul.bf16.gmra.mxu0 %v312
        %v584 = vpop.f32.mrf.mxu0
        %v585 = vadd.f32 %v354, %v584
        %v586 = vpop.f32.mrf.mxu0
        %v587 = vadd.f32 %v354, %v586
        %588 = vmatmul.bf16.gmra.mxu0 %v313
        %v589 = vpop.f32.mrf.mxu0
        %v590 = vadd.f32 %v354, %v589
        %v591 = vpop.f32.mrf.mxu0
        %v592 = vadd.f32 %v354, %v591
        %593 = vmatmul.bf16.gmra.mxu0 %v314
        %v594 = vpop.f32.mrf.mxu0
        %v595 = vadd.f32 %v354, %v594
        %v596 = vpop.f32.mrf.mxu0
        %v597 = vadd.f32 %v354, %v596
        %598 = vmatmul.bf16.gmra.mxu0 %v315
        %v599 = vpop.f32.mrf.mxu0
        %v600 = vadd.f32 %v354, %v599
        %v601 = vpop.f32.mrf.mxu0
        %v602 = vadd.f32 %v354, %v601
        %603 = vmatmul.bf16.gmra.mxu0 %v316
        %v604 = vpop.f32.mrf.mxu0
        %v605 = vadd.f32 %v354, %v604
        %v606 = vpop.f32.mrf.mxu0
        %v607 = vadd.f32 %v354, %v606
        %608 = vmatmul.bf16.gmra.mxu0 %v317
        %v609 = vpop.f32.mrf.mxu0
        %v610 = vadd.f32 %v354, %v609
        %v611 = vpop.f32.mrf.mxu0
        %v612 = vadd.f32 %v354, %v611
        %613 = vmatmul.bf16.gmra.mxu0 %v318
        %v614 = vpop.f32.mrf.mxu0
        %v615 = vadd.f32 %v354, %v614
        %v616 = vpop.f32.mrf.mxu0
        %v617 = vadd.f32 %v354, %v616
        %618 = vdwg.mxu0
        %619 = vmatpush.bf16.msra.mxu0 %v487
        %620 = vmatpush.bf16.msra.mxu0 %v483
        %621 = vmatpush.bf16.msra.mxu0 %v479
        %622 = vmatpush.bf16.msra.mxu0 %v475
        %623 = vmatpush.bf16.msra.mxu0 %v471
        %624 = vmatpush.bf16.msra.mxu0 %v467
        %625 = vmatpush.bf16.msra.mxu0 %v463
        %626 = vmatpush.bf16.msra.mxu0 %v459
        %627 = vmatmul.bf16.gmra.mxu0 %v311
        %v628 = vpop.f32.mrf.mxu0
        %v629 = vadd.f32 %v355, %v628
        %v630 = vpop.f32.mrf.mxu0
        %v631 = vadd.f32 %v355, %v630
        %632 = vmatmul.bf16.gmra.mxu0 %v312
        %v633 = vpop.f32.mrf.mxu0
        %v634 = vadd.f32 %v355, %v633
        %v635 = vpop.f32.mrf.mxu0
        %v636 = vadd.f32 %v355, %v635
        %637 = vmatmul.bf16.gmra.mxu0 %v313
        %v638 = vpop.f32.mrf.mxu0
        %v639 = vadd.f32 %v355, %v638
        %v640 = vpop.f32.mrf.mxu0
        %v641 = vadd.f32 %v355, %v640
        %642 = vmatmul.bf16.gmra.mxu0 %v314
        %v643 = vpop.f32.mrf.mxu0
        %v644 = vadd.f32 %v355, %v643
        %v645 = vpop.f32.mrf.mxu0
        %v646 = vadd.f32 %v355, %v645
        %647 = vmatmul.bf16.gmra.mxu0 %v315
        %v648 = vpop.f32.mrf.mxu0
        %v649 = vadd.f32 %v355, %v648
        %v650 = vpop.f32.mrf.mxu0
        %v651 = vadd.f32 %v355, %v650
        %652 = vmatmul.bf16.gmra.mxu0 %v316
        %v653 = vpop.f32.mrf.mxu0
        %v654 = vadd.f32 %v355, %v653
        %v655 = vpop.f32.mrf.mxu0
        %v656 = vadd.f32 %v355, %v655
        %657 = vmatmul.bf16.gmra.mxu0 %v317
        %v658 = vpop.f32.mrf.mxu0
        %v659 = vadd.f32 %v355, %v658
        %v660 = vpop.f32.mrf.mxu0
        %v661 = vadd.f32 %v355, %v660
        %662 = vmatmul.bf16.gmra.mxu0 %v318
        %v663 = vpop.f32.mrf.mxu0
        %v664 = vadd.f32 %v355, %v663
        %v665 = vpop.f32.mrf.mxu0
        %v666 = vadd.f32 %v355, %v665
        %667 = vdwg.mxu0
        %668 = vmatpush.bf16.msra.mxu0 %v488
        %669 = vmatpush.bf16.msra.mxu0 %v484
        %670 = vmatpush.bf16.msra.mxu0 %v480
        %671 = vmatpush.bf16.msra.mxu0 %v476
        %672 = vmatpush.bf16.msra.mxu0 %v472
        %673 = vmatpush.bf16.msra.mxu0 %v468
        %674 = vmatpush.bf16.msra.mxu0 %v464
        %675 = vmatpush.bf16.msra.mxu0 %v460
        %676 = vmatmul.bf16.gmra.mxu0 %v311
        %v677 = vpop.f32.mrf.mxu0
        %v678 = vadd.f32 %v356, %v677
        %v679 = vpop.f32.mrf.mxu0
        %v680 = vadd.f32 %v356, %v679
        %681 = vmatmul.bf16.gmra.mxu0 %v312
        %v682 = vpop.f32.mrf.mxu0
        %v683 = vadd.f32 %v356, %v682
        %v684 = vpop.f32.mrf.mxu0
        %v685 = vadd.f32 %v356, %v684
        %686 = vmatmul.bf16.gmra.mxu0 %v313
        %v687 = vpop.f32.mrf.mxu0
        %v688 = vadd.f32 %v356, %v687
        %v689 = vpop.f32.mrf.mxu0
        %v690 = vadd.f32 %v356, %v689
        %691 = vmatmul.bf16.gmra.mxu0 %v314
        %v692 = vpop.f32.mrf.mxu0
        %v693 = vadd.f32 %v356, %v692
        %v694 = vpop.f32.mrf.mxu0
        %v695 = vadd.f32 %v356, %v694
        %696 = vmatmul.bf16.gmra.mxu0 %v315
        %v697 = vpop.f32.mrf.mxu0
        %v698 = vadd.f32 %v356, %v697
        %v699 = vpop.f32.mrf.mxu0
        %v700 = vadd.f32 %v356, %v699
        %701 = vmatmul.bf16.gmra.mxu0 %v316
        %v702 = vpop.f32.mrf.mxu0
        %v703 = vadd.f32 %v356, %v702
        %v704 = vpop.f32.mrf.mxu0
        %v705 = vadd.f32 %v356, %v704
        %706 = vmatmul.bf16.gmra.mxu0 %v317
        %v707 = vpop.f32.mrf.mxu0
        %v708 = vadd.f32 %v356, %v707
        %v709 = vpop.f32.mrf.mxu0
        %v710 = vadd.f32 %v356, %v709
        %711 = vmatmul.bf16.gmra.mxu0 %v318
        %v712 = vpop.f32.mrf.mxu0
        %v713 = vadd.f32 %v356, %v712
        %v714 = vpop.f32.mrf.mxu0
        %v715 = vadd.f32 %v356, %v714
        %716 = vdwg.mxu0
        %v717 = vmax.f32 %v531, 0.0
        %v718 = vmax.f32 %v580, 0.0
        %v719 = vmax.f32 %v533, 0.0
        %v720 = vmax.f32 %v582, 0.0
        %v721 = vmax.f32 %v536, 0.0
        %v722 = vmax.f32 %v585, 0.0
        %v723 = vmax.f32 %v538, 0.0
        %v724 = vmax.f32 %v587, 0.0
        %v725 = vmax.f32 %v541, 0.0
        %v726 = vmax.f32 %v590, 0.0
        %v727 = vmax.f32 %v543, 0.0
        %v728 = vmax.f32 %v592, 0.0
        %v729 = vmax.f32 %v546, 0.0
        %v730 = vmax.f32 %v595, 0.0
        %v731 = vmax.f32 %v548, 0.0
        %v732 = vmax.f32 %v597, 0.0
        %v733 = vmax.f32 %v551, 0.0
        %v734 = vmax.f32 %v600, 0.0
        %v735 = vmax.f32 %v553, 0.0
        %v736 = vmax.f32 %v602, 0.0
        %v737 = vmax.f32 %v556, 0.0
        %v738 = vmax.f32 %v605, 0.0
        %v739 = vmax.f32 %v558, 0.0
        %v740 = vmax.f32 %v607, 0.0
        %v741 = vmax.f32 %v561, 0.0
        %v742 = vmax.f32 %v610, 0.0
        %v743 = vmax.f32 %v563, 0.0
        %v744 = vmax.f32 %v612, 0.0
        %v745 = vmax.f32 %v566, 0.0
        %v746 = vmax.f32 %v615, 0.0
        %v747 = vmax.f32 %v568, 0.0
        %v748 = vmax.f32 %v617, 0.0
        %v749 = vpack.c.bf16 %v719, %v717
        %v750 = vpack.c.bf16 %v720, %v718
        %v751 = vpack.c.bf16 %v723, %v721
        %v752 = vpack.c.bf16 %v724, %v722
        %v753 = vpack.c.bf16 %v727, %v725
        %v754 = vpack.c.bf16 %v728, %v726
        %v755 = vpack.c.bf16 %v731, %v729
        %v756 = vpack.c.bf16 %v732, %v730
        %v757 = vpack.c.bf16 %v735, %v733
        %v758 = vpack.c.bf16 %v736, %v734
        %v759 = vpack.c.bf16 %v739, %v737
        %v760 = vpack.c.bf16 %v740, %v738
        %v761 = vpack.c.bf16 %v743, %v741
        %v762 = vpack.c.bf16 %v744, %v742
        %v763 = vpack.c.bf16 %v747, %v745
        %v764 = vpack.c.bf16 %v748, %v746
        %v765 = vld [vmem:[#allocation8] sm:$0xff]
        %v766 = vld [vmem:[#allocation8 + $0x8] sm:$0xff]
        %v767 = vld [vmem:[#allocation8 + $0x10] sm:$0xff]
        %v768 = vld [vmem:[#allocation8 + $0x18] sm:$0xff]
        %v769 = vld [vmem:[#allocation8 + $0x20] sm:$0xff]
        %v770 = vld [vmem:[#allocation8 + $0x28] sm:$0xff]
        %v771 = vld [vmem:[#allocation8 + $0x30] sm:$0xff]
        %v772 = vld [vmem:[#allocation8 + $0x38] sm:$0xff]
        %v773 = vld [vmem:[#allocation8 + $0x40] sm:$0xff]
        %v774 = vld [vmem:[#allocation8 + $0x48] sm:$0xff]
        %v775 = vld [vmem:[#allocation8 + $0x50] sm:$0xff]
        %v776 = vld [vmem:[#allocation8 + $0x58] sm:$0xff]
        %v777 = vld [vmem:[#allocation8 + $0x60] sm:$0xff]
        %v778 = vld [vmem:[#allocation8 + $0x68] sm:$0xff]
        %v779 = vld [vmem:[#allocation8 + $0x70] sm:$0xff]
        %v780 = vld [vmem:[#allocation8 + $0x78] sm:$0xff]
        %v781 = vld [vmem:[#allocation8 + $0x80] sm:$0xff]
        %v782 = vld [vmem:[#allocation8 + $0x88] sm:$0xff]
        %v783 = vld [vmem:[#allocation8 + $0x90] sm:$0xff]
        %v784 = vld [vmem:[#allocation8 + $0x98] sm:$0xff]
        %v785 = vld [vmem:[#allocation8 + $0xa0] sm:$0xff]
        %v786 = vld [vmem:[#allocation8 + $0xa8] sm:$0xff]
        %v787 = vld [vmem:[#allocation8 + $0xb0] sm:$0xff]
        %v788 = vld [vmem:[#allocation8 + $0xb8] sm:$0xff]
        %v789 = vld [vmem:[#allocation8 + $0xc0] sm:$0xff]
        %v790 = vld [vmem:[#allocation8 + $0xc8] sm:$0xff]
        %v791 = vld [vmem:[#allocation8 + $0xd0] sm:$0xff]
        %v792 = vld [vmem:[#allocation8 + $0xd8] sm:$0xff]
        %v793 = vld [vmem:[#allocation8 + $0xe0] sm:$0xff]
        %v794 = vld [vmem:[#allocation8 + $0xe8] sm:$0xff]
        %v795 = vld [vmem:[#allocation8 + $0xf0] sm:$0xff]
        %v796 = vld [vmem:[#allocation8 + $0xf8] sm:$0xff]
        %v797 = vld [vmem:[%s4] sm:$0x3]
        %v799 = vperm.slane %v797, 0
        %v800 = vperm.slane %v797, 1
        %v835 = vunpack.c.l.b16 %v765
        %v836 = vunpack.c.h.b16 %v765
        %v837 = vunpack.c.l.b16 %v766
        %v838 = vunpack.c.h.b16 %v766
        %v839 = vunpack.c.l.b16 %v767
        %v840 = vunpack.c.h.b16 %v767
        %v841 = vunpack.c.l.b16 %v768
        %v842 = vunpack.c.h.b16 %v768
        %v843 = vunpack.c.l.b16 %v769
        %v844 = vunpack.c.h.b16 %v769
        %v845 = vunpack.c.l.b16 %v770
        %v846 = vunpack.c.h.b16 %v770
        %v847 = vunpack.c.l.b16 %v771
        %v848 = vunpack.c.h.b16 %v771
        %v849 = vunpack.c.l.b16 %v772
        %v850 = vunpack.c.h.b16 %v772
        %v851 = vunpack.c.l.b16 %v773
        %v852 = vunpack.c.h.b16 %v773
        %v853 = vunpack.c.l.b16 %v774
        %v854 = vunpack.c.h.b16 %v774
        %v855 = vunpack.c.l.b16 %v775
        %v856 = vunpack.c.h.b16 %v775
        %v857 = vunpack.c.l.b16 %v776
        %v858 = vunpack.c.h.b16 %v776
        %v859 = vunpack.c.l.b16 %v777
        %v860 = vunpack.c.h.b16 %v777
        %v861 = vunpack.c.l.b16 %v778
        %v862 = vunpack.c.h.b16 %v778
        %v863 = vunpack.c.l.b16 %v779
        %v864 = vunpack.c.h.b16 %v779
        %v865 = vunpack.c.l.b16 %v780
        %v866 = vunpack.c.h.b16 %v780
        %v867 = vunpack.c.l.b16 %v781
        %v868 = vunpack.c.h.b16 %v781
        %v869 = vunpack.c.l.b16 %v782
        %v870 = vunpack.c.h.b16 %v782
        %v871 = vunpack.c.l.b16 %v783
        %v872 = vunpack.c.h.b16 %v783
        %v873 = vunpack.c.l.b16 %v784
        %v874 = vunpack.c.h.b16 %v784
        %v875 = vunpack.c.l.b16 %v785
        %v876 = vunpack.c.h.b16 %v785
        %v877 = vunpack.c.l.b16 %v786
        %v878 = vunpack.c.h.b16 %v786
        %v879 = vunpack.c.l.b16 %v787
        %v880 = vunpack.c.h.b16 %v787
        %v881 = vunpack.c.l.b16 %v788
        %v882 = vunpack.c.h.b16 %v788
        %v883 = vunpack.c.l.b16 %v789
        %v884 = vunpack.c.h.b16 %v789
        %v885 = vunpack.c.l.b16 %v790
        %v886 = vunpack.c.h.b16 %v790
        %v887 = vunpack.c.l.b16 %v791
        %v888 = vunpack.c.h.b16 %v791
        %v889 = vunpack.c.l.b16 %v792
        %v890 = vunpack.c.h.b16 %v792
        %v891 = vunpack.c.l.b16 %v793
        %v892 = vunpack.c.h.b16 %v793
        %v893 = vunpack.c.l.b16 %v794
        %v894 = vunpack.c.h.b16 %v794
        %v895 = vunpack.c.l.b16 %v795
        %v896 = vunpack.c.h.b16 %v795
        %v897 = vunpack.c.l.b16 %v796
        %v898 = vunpack.c.h.b16 %v796
        %v899 = vpack.c.b16 %v837, %v835
        %v900 = vpack.c.b16 %v838, %v836
        %v901 = vpack.c.b16 %v841, %v839
        %v902 = vpack.c.b16 %v842, %v840
        %v903 = vpack.c.b16 %v845, %v843
        %v904 = vpack.c.b16 %v846, %v844
        %v905 = vpack.c.b16 %v849, %v847
        %v906 = vpack.c.b16 %v850, %v848
        %v907 = vpack.c.b16 %v853, %v851
        %v908 = vpack.c.b16 %v854, %v852
        %v909 = vpack.c.b16 %v857, %v855
        %v910 = vpack.c.b16 %v858, %v856
        %v911 = vpack.c.b16 %v861, %v859
        %v912 = vpack.c.b16 %v862, %v860
        %v913 = vpack.c.b16 %v865, %v863
        %v914 = vpack.c.b16 %v866, %v864
        %v915 = vpack.c.b16 %v869, %v867
        %v916 = vpack.c.b16 %v870, %v868
        %v917 = vpack.c.b16 %v873, %v871
        %v918 = vpack.c.b16 %v874, %v872
        %v919 = vpack.c.b16 %v877, %v875
        %v920 = vpack.c.b16 %v878, %v876
        %v921 = vpack.c.b16 %v881, %v879
        %v922 = vpack.c.b16 %v882, %v880
        %v923 = vpack.c.b16 %v885, %v883
        %v924 = vpack.c.b16 %v886, %v884
        %v925 = vpack.c.b16 %v889, %v887
        %v926 = vpack.c.b16 %v890, %v888
        %v927 = vpack.c.b16 %v893, %v891
        %v928 = vpack.c.b16 %v894, %v892
        %v929 = vpack.c.b16 %v897, %v895
        %v930 = vpack.c.b16 %v898, %v896
        %963 = vmatpush.bf16.msra.mxu0 %v913
        %964 = vmatpush.bf16.msra.mxu0 %v911
        %965 = vmatpush.bf16.msra.mxu0 %v909
        %966 = vmatpush.bf16.msra.mxu0 %v907
        %967 = vmatpush.bf16.msra.mxu0 %v905
        %968 = vmatpush.bf16.msra.mxu0 %v903
        %969 = vmatpush.bf16.msra.mxu0 %v901
        %970 = vmatpush.bf16.msra.mxu0 %v899
        %971 = vmatmul.bf16.gmra.mxu0 %v749
        %v972 = vpop.f32.mrf.mxu0
        %v973 = vadd.f32 %v799, %v972
        %v974 = vpop.f32.mrf.mxu0
        %v975 = vadd.f32 %v799, %v974
        %976 = vmatmul.bf16.gmra.mxu0 %v751
        %v977 = vpop.f32.mrf.mxu0
        %v978 = vadd.f32 %v799, %v977
        %v979 = vpop.f32.mrf.mxu0
        %v980 = vadd.f32 %v799, %v979
        %981 = vmatmul.bf16.gmra.mxu0 %v753
        %v982 = vpop.f32.mrf.mxu0
        %v983 = vadd.f32 %v799, %v982
        %v984 = vpop.f32.mrf.mxu0
        %v985 = vadd.f32 %v799, %v984
        %986 = vmatmul.bf16.gmra.mxu0 %v755
        %v987 = vpop.f32.mrf.mxu0
        %v988 = vadd.f32 %v799, %v987
        %v989 = vpop.f32.mrf.mxu0
        %v990 = vadd.f32 %v799, %v989
        %991 = vmatmul.bf16.gmra.mxu0 %v757
        %v992 = vpop.f32.mrf.mxu0
        %v993 = vadd.f32 %v799, %v992
        %v994 = vpop.f32.mrf.mxu0
        %v995 = vadd.f32 %v799, %v994
        %996 = vmatmul.bf16.gmra.mxu0 %v759
        %v997 = vpop.f32.mrf.mxu0
        %v998 = vadd.f32 %v799, %v997
        %v999 = vpop.f32.mrf.mxu0
        %v1000 = vadd.f32 %v799, %v999
        %1001 = vmatmul.bf16.gmra.mxu0 %v761
        %v1002 = vpop.f32.mrf.mxu0
        %v1003 = vadd.f32 %v799, %v1002
        %v1004 = vpop.f32.mrf.mxu0
        %v1005 = vadd.f32 %v799, %v1004
        %1006 = vmatmul.bf16.gmra.mxu0 %v763
        %v1007 = vpop.f32.mrf.mxu0
        %v1008 = vadd.f32 %v799, %v1007
        %v1009 = vpop.f32.mrf.mxu0
        %v1010 = vadd.f32 %v799, %v1009
        %1011 = vdwg.mxu0
        %1012 = vmatpush.bf16.msra.mxu0 %v929
        %1013 = vmatpush.bf16.msra.mxu0 %v927
        %1014 = vmatpush.bf16.msra.mxu0 %v925
        %1015 = vmatpush.bf16.msra.mxu0 %v923
        %1016 = vmatpush.bf16.msra.mxu0 %v921
        %1017 = vmatpush.bf16.msra.mxu0 %v919
        %1018 = vmatpush.bf16.msra.mxu0 %v917
        %1019 = vmatpush.bf16.msra.mxu0 %v915
        %1020 = vmatmul.bf16.gmra.mxu0 %v750
        %v1021 = vpop.f32.mrf.mxu0
        %v1022 = vadd.f32 %v973, %v1021
        %v1023 = vpop.f32.mrf.mxu0
        %v1024 = vadd.f32 %v975, %v1023
        %1025 = vmatmul.bf16.gmra.mxu0 %v752
        %v1026 = vpop.f32.mrf.mxu0
        %v1027 = vadd.f32 %v978, %v1026
        %v1028 = vpop.f32.mrf.mxu0
        %v1029 = vadd.f32 %v980, %v1028
        %1030 = vmatmul.bf16.gmra.mxu0 %v754
        %v1031 = vpop.f32.mrf.mxu0
        %v1032 = vadd.f32 %v983, %v1031
        %v1033 = vpop.f32.mrf.mxu0
        %v1034 = vadd.f32 %v985, %v1033
        %1035 = vmatmul.bf16.gmra.mxu0 %v756
        %v1036 = vpop.f32.mrf.mxu0
        %v1037 = vadd.f32 %v988, %v1036
        %v1038 = vpop.f32.mrf.mxu0
        %v1039 = vadd.f32 %v990, %v1038
        %1040 = vmatmul.bf16.gmra.mxu0 %v758
        %v1041 = vpop.f32.mrf.mxu0
        %v1042 = vadd.f32 %v993, %v1041
        %v1043 = vpop.f32.mrf.mxu0
        %v1044 = vadd.f32 %v995, %v1043
        %1045 = vmatmul.bf16.gmra.mxu0 %v760
        %v1046 = vpop.f32.mrf.mxu0
        %v1047 = vadd.f32 %v998, %v1046
        %v1048 = vpop.f32.mrf.mxu0
        %v1049 = vadd.f32 %v1000, %v1048
        %1050 = vmatmul.bf16.gmra.mxu0 %v762
        %v1051 = vpop.f32.mrf.mxu0
        %v1052 = vadd.f32 %v1003, %v1051
        %v1053 = vpop.f32.mrf.mxu0
        %v1054 = vadd.f32 %v1005, %v1053
        %1055 = vmatmul.bf16.gmra.mxu0 %v764
        %v1056 = vpop.f32.mrf.mxu0
        %v1057 = vadd.f32 %v1008, %v1056
        %v1058 = vpop.f32.mrf.mxu0
        %v1059 = vadd.f32 %v1010, %v1058
        %1060 = vdwg.mxu0
        %1061 = vmatpush.bf16.msra.mxu0 %v914
        %1062 = vmatpush.bf16.msra.mxu0 %v912
        %1063 = vmatpush.bf16.msra.mxu0 %v910
        %1064 = vmatpush.bf16.msra.mxu0 %v908
        %1065 = vmatpush.bf16.msra.mxu0 %v906
        %1066 = vmatpush.bf16.msra.mxu0 %v904
        %1067 = vmatpush.bf16.msra.mxu0 %v902
        %1068 = vmatpush.bf16.msra.mxu0 %v900
        %1069 = vmatmul.bf16.gmra.mxu0 %v749
        %v1070 = vpop.f32.mrf.mxu0
        %v1071 = vadd.f32 %v800, %v1070
        %v1072 = vpop.f32.mrf.mxu0
        %v1073 = vadd.f32 %v800, %v1072
        %1074 = vmatmul.bf16.gmra.mxu0 %v751
        %v1075 = vpop.f32.mrf.mxu0
        %v1076 = vadd.f32 %v800, %v1075
        %v1077 = vpop.f32.mrf.mxu0
        %v1078 = vadd.f32 %v800, %v1077
        %1079 = vmatmul.bf16.gmra.mxu0 %v753
        %v1080 = vpop.f32.mrf.mxu0
        %v1081 = vadd.f32 %v800, %v1080
        %v1082 = vpop.f32.mrf.mxu0
        %v1083 = vadd.f32 %v800, %v1082
        %1084 = vmatmul.bf16.gmra.mxu0 %v755
        %v1085 = vpop.f32.mrf.mxu0
        %v1086 = vadd.f32 %v800, %v1085
        %v1087 = vpop.f32.mrf.mxu0
        %v1088 = vadd.f32 %v800, %v1087
        %1089 = vmatmul.bf16.gmra.mxu0 %v757
        %v1090 = vpop.f32.mrf.mxu0
        %v1091 = vadd.f32 %v800, %v1090
        %v1092 = vpop.f32.mrf.mxu0
        %v1093 = vadd.f32 %v800, %v1092
        %1094 = vmatmul.bf16.gmra.mxu0 %v759
        %v1095 = vpop.f32.mrf.mxu0
        %v1096 = vadd.f32 %v800, %v1095
        %v1097 = vpop.f32.mrf.mxu0
        %v1098 = vadd.f32 %v800, %v1097
        %1099 = vmatmul.bf16.gmra.mxu0 %v761
        %v1100 = vpop.f32.mrf.mxu0
        %v1101 = vadd.f32 %v800, %v1100
        %v1102 = vpop.f32.mrf.mxu0
        %v1103 = vadd.f32 %v800, %v1102
        %1104 = vmatmul.bf16.gmra.mxu0 %v763
        %v1105 = vpop.f32.mrf.mxu0
        %v1106 = vadd.f32 %v800, %v1105
        %v1107 = vpop.f32.mrf.mxu0
        %v1108 = vadd.f32 %v800, %v1107
        %1109 = vdwg.mxu0
        %1110 = vmatpush.bf16.msra.mxu0 %v930
        %1111 = vmatpush.bf16.msra.mxu0 %v928
        %1112 = vmatpush.bf16.msra.mxu0 %v926
        %1113 = vmatpush.bf16.msra.mxu0 %v924
        %1114 = vmatpush.bf16.msra.mxu0 %v922
        %1115 = vmatpush.bf16.msra.mxu0 %v920
        %1116 = vmatpush.bf16.msra.mxu0 %v918
        %1117 = vmatpush.bf16.msra.mxu0 %v916
        %1118 = vmatmul.bf16.gmra.mxu0 %v750
        %v1119 = vpop.f32.mrf.mxu0
        %v1120 = vadd.f32 %v1071, %v1119
        %v1121 = vpop.f32.mrf.mxu0
        %v1122 = vadd.f32 %v1073, %v1121
        %1123 = vmatmul.bf16.gmra.mxu0 %v752
        %v1124 = vpop.f32.mrf.mxu0
        %v1125 = vadd.f32 %v1076, %v1124
        %v1126 = vpop.f32.mrf.mxu0
        %v1127 = vadd.f32 %v1078, %v1126
        %1128 = vmatmul.bf16.gmra.mxu0 %v754
        %v1129 = vpop.f32.mrf.mxu0
        %v1130 = vadd.f32 %v1081, %v1129
        %v1131 = vpop.f32.mrf.mxu0
        %v1132 = vadd.f32 %v1083, %v1131
        %1133 = vmatmul.bf16.gmra.mxu0 %v756
        %v1134 = vpop.f32.mrf.mxu0
        %v1135 = vadd.f32 %v1086, %v1134
        %v1136 = vpop.f32.mrf.mxu0
        %v1137 = vadd.f32 %v1088, %v1136
        %1138 = vmatmul.bf16.gmra.mxu0 %v758
        %v1139 = vpop.f32.mrf.mxu0
        %v1140 = vadd.f32 %v1091, %v1139
        %v1141 = vpop.f32.mrf.mxu0
        %v1142 = vadd.f32 %v1093, %v1141
        %1143 = vmatmul.bf16.gmra.mxu0 %v760
        %v1144 = vpop.f32.mrf.mxu0
        %v1145 = vadd.f32 %v1096, %v1144
        %v1146 = vpop.f32.mrf.mxu0
        %v1147 = vadd.f32 %v1098, %v1146
        %1148 = vmatmul.bf16.gmra.mxu0 %v762
        %v1149 = vpop.f32.mrf.mxu0
        %v1150 = vadd.f32 %v1101, %v1149
        %v1151 = vpop.f32.mrf.mxu0
        %v1152 = vadd.f32 %v1103, %v1151
        %1153 = vmatmul.bf16.gmra.mxu0 %v764
        %v1154 = vpop.f32.mrf.mxu0
        %v1155 = vadd.f32 %v1106, %v1154
        %v1156 = vpop.f32.mrf.mxu0
        %v1157 = vadd.f32 %v1108, %v1156
        %1158 = vdwg.mxu0
        %v1159 = vadd.f32 %v1022, %v629
        %v1160 = vadd.f32 %v1120, %v678
        %v1161 = vadd.f32 %v1024, %v631
        %v1162 = vadd.f32 %v1122, %v680
        %v1163 = vadd.f32 %v1027, %v634
        %v1164 = vadd.f32 %v1125, %v683
        %v1165 = vadd.f32 %v1029, %v636
        %v1166 = vadd.f32 %v1127, %v685
        %v1167 = vadd.f32 %v1032, %v639
        %v1168 = vadd.f32 %v1130, %v688
        %v1169 = vadd.f32 %v1034, %v641
        %v1170 = vadd.f32 %v1132, %v690
        %v1171 = vadd.f32 %v1037, %v644
        %v1172 = vadd.f32 %v1135, %v693
        %v1173 = vadd.f32 %v1039, %v646
        %v1174 = vadd.f32 %v1137, %v695
        %v1175 = vadd.f32 %v1042, %v649
        %v1176 = vadd.f32 %v1140, %v698
        %v1177 = vadd.f32 %v1044, %v651
        %v1178 = vadd.f32 %v1142, %v700
        %v1179 = vadd.f32 %v1047, %v654
        %v1180 = vadd.f32 %v1145, %v703
        %v1181 = vadd.f32 %v1049, %v656
        %v1182 = vadd.f32 %v1147, %v705
        %v1183 = vadd.f32 %v1052, %v659
        %v1184 = vadd.f32 %v1150, %v708
        %v1185 = vadd.f32 %v1054, %v661
        %v1186 = vadd.f32 %v1152, %v710
        %v1187 = vadd.f32 %v1057, %v664
        %v1188 = vadd.f32 %v1155, %v713
        %v1189 = vadd.f32 %v1059, %v666
        %v1190 = vadd.f32 %v1157, %v715
        %v1191 = vmax.f32 %v1159, 0.0
        %v1192 = vmax.f32 %v1160, 0.0
        %v1193 = vmax.f32 %v1161, 0.0
        %v1194 = vmax.f32 %v1162, 0.0
        %v1195 = vmax.f32 %v1163, 0.0
        %v1196 = vmax.f32 %v1164, 0.0
        %v1197 = vmax.f32 %v1165, 0.0
        %v1198 = vmax.f32 %v1166, 0.0
        %v1199 = vmax.f32 %v1167, 0.0
        %v1200 = vmax.f32 %v1168, 0.0
        %v1201 = vmax.f32 %v1169, 0.0
        %v1202 = vmax.f32 %v1170, 0.0
        %v1203 = vmax.f32 %v1171, 0.0
        %v1204 = vmax.f32 %v1172, 0.0
        %v1205 = vmax.f32 %v1173, 0.0
        %v1206 = vmax.f32 %v1174, 0.0
        %v1207 = vmax.f32 %v1175, 0.0
        %v1208 = vmax.f32 %v1176, 0.0
        %v1209 = vmax.f32 %v1177, 0.0
        %v1210 = vmax.f32 %v1178, 0.0
        %v1211 = vmax.f32 %v1179, 0.0
        %v1212 = vmax.f32 %v1180, 0.0
        %v1213 = vmax.f32 %v1181, 0.0
        %v1214 = vmax.f32 %v1182, 0.0
        %v1215 = vmax.f32 %v1183, 0.0
        %v1216 = vmax.f32 %v1184, 0.0
        %v1217 = vmax.f32 %v1185, 0.0
        %v1218 = vmax.f32 %v1186, 0.0
        %v1219 = vmax.f32 %v1187, 0.0
        %v1220 = vmax.f32 %v1188, 0.0
        %v1221 = vmax.f32 %v1189, 0.0
        %v1222 = vmax.f32 %v1190, 0.0
        %1223 = vst [vmem:[%s292] sm:$0xff] %v1191
        %1224 = vst [vmem:[%s292 + $0x8] sm:$0xff] %v1192
        %1225 = vst [vmem:[%s292 + $0x10] sm:$0xff] %v1193
        %1226 = vst [vmem:[%s292 + $0x18] sm:$0xff] %v1194
        %1227 = vst [vmem:[%s292 + $0x20] sm:$0xff] %v1195
        %1228 = vst [vmem:[%s292 + $0x28] sm:$0xff] %v1196
        %1229 = vst [vmem:[%s292 + $0x30] sm:$0xff] %v1197
        %1230 = vst [vmem:[%s292 + $0x38] sm:$0xff] %v1198
        %1231 = vst [vmem:[%s292 + $0x40] sm:$0xff] %v1199
        %1232 = vst [vmem:[%s292 + $0x48] sm:$0xff] %v1200
        %1233 = vst [vmem:[%s292 + $0x50] sm:$0xff] %v1201
        %1234 = vst [vmem:[%s292 + $0x58] sm:$0xff] %v1202
        %1235 = vst [vmem:[%s292 + $0x60] sm:$0xff] %v1203
        %1236 = vst [vmem:[%s292 + $0x68] sm:$0xff] %v1204
        %1237 = vst [vmem:[%s292 + $0x70] sm:$0xff] %v1205
        %1238 = vst [vmem:[%s292 + $0x78] sm:$0xff] %v1206
        %1239 = vst [vmem:[%s292 + $0x80] sm:$0xff] %v1207
        %1240 = vst [vmem:[%s292 + $0x88] sm:$0xff] %v1208
        %1241 = vst [vmem:[%s292 + $0x90] sm:$0xff] %v1209
        %1242 = vst [vmem:[%s292 + $0x98] sm:$0xff] %v1210
        %1243 = vst [vmem:[%s292 + $0xa0] sm:$0xff] %v1211
        %1244 = vst [vmem:[%s292 + $0xa8] sm:$0xff] %v1212
        %1245 = vst [vmem:[%s292 + $0xb0] sm:$0xff] %v1213
        %1246 = vst [vmem:[%s292 + $0xb8] sm:$0xff] %v1214
        %1247 = vst [vmem:[%s292 + $0xc0] sm:$0xff] %v1215
        %1248 = vst [vmem:[%s292 + $0xc8] sm:$0xff] %v1216
        %1249 = vst [vmem:[%s292 + $0xd0] sm:$0xff] %v1217
        %1250 = vst [vmem:[%s292 + $0xd8] sm:$0xff] %v1218
        %1251 = vst [vmem:[%s292 + $0xe0] sm:$0xff] %v1219
        %1252 = vst [vmem:[%s292 + $0xe8] sm:$0xff] %v1220
        %1253 = vst [vmem:[%s292 + $0xf0] sm:$0xff] %v1221
        %1254 = vst [vmem:[%s292 + $0xf8] sm:$0xff] %v1222
        %s1255 = sand.u32 %s142, 1
        %s1256 = scalar_lea.sflag [#allocation4], %s1255
        %s1257 = sand.u32 %s142, 1
        %s1258 = smul.addr %s1257, 256
        %s1259 = scalar_lea.vmem [#allocation10], %s1258
        // Predicated region
        $region57: #{tpu_custom_call.1} parent=39 // pred_check
          %p1260 = pneg %p152
        $region58: #{tpu_custom_call.1} parent=39 // pred_check_branch
          %1262 = sbr.rel (%p1260) target = $region60
        $region59: #{tpu_custom_call.1} parent=39 // pred_region
          %s1263 = smul.u32 16, %s24
          %1265 = vsyncadd %s1256, 0
          %s1266 = smul.addr %s1263, 2
          %s1267 = smul.addr %s1266, 8
          %s1268 = scalar_lea.hbm %s5, %s1267
          %s1269 = sshll.u32 %s1259, 4
          %s1270 = int_to_ptr.vmem [resolvable:$true] %s1269
          %s1271 = sshll.u32 %s1268, 4
          %s1272 = int_to_ptr.hbm [resolvable:$true] %s1271
          %1277 = dma.vmem_to_hbm [thread:$0]  %s1270, 4096, %s1272, %s1256, 256, 256, 16
        $region60: #{tpu_custom_call.1} parent=39 // pred_fallthru
          _
      $region40: #{tpu_custom_call.1} parent=5 // pred_fallthru
        _
      %p1278 = scmp.le.s32.totalorder 2, %s19
      // Predicated region
      $region61: #{tpu_custom_call.1} parent=5 // pred_check
        %p1279 = pneg %p1278
      $region62: #{tpu_custom_call.1} parent=5 // pred_check_branch
        %1281 = sbr.rel (%p1279) target = $region64
      $region63: #{tpu_custom_call.1} parent=5 // pred_region
        %s1282 = ssub.s32 %s19, 2
        // Predicated region
        $region65: #{tpu_custom_call.1} parent=63 // pred_check
          %p1283 = pneg %p158
        $region66: #{tpu_custom_call.1} parent=63 // pred_check_branch
          %1285 = sbr.rel (%p1283) target = $region68
        $region67: #{tpu_custom_call.1} parent=63 // pred_region
          %s1286 = sand.u32 %s143, 1
          %s1287 = scalar_lea.sflag [#allocation4], %s1286
          %s1288 = sand.u32 %s143, 1
          %s1289 = smul.addr %s1288, 256
          %s1290 = scalar_lea.vmem [#allocation10], %s1289
          %1292 = dma.done %s1287, 4096
        $region68: #{tpu_custom_call.1} parent=63 // pred_fallthru
          _
      $region64: #{tpu_custom_call.1} parent=5 // pred_fallthru
        _
    $region6: #{tpu_custom_call.1} parent=1 // loop_footer
      %s23 = sadd.s32 1, %s19
    $region7: #{tpu_custom_call.1} parent=1 // loop_footer_branch
      %18 = sbr.rel target = $region3
    $region8: #{tpu_custom_call.1} parent=1 // loop_exit
      _
    %1293 = vsyncpa [#allocation3], 1
    %s1294 = scalar_lea.sflag [#allocation3], 1
    %1295 = vsyncpa %s1294, 1
    %1296 = vsyncpa [#allocation6], 1
    %1297 = vsyncpa [#allocation9], 1
    %1298 = vsyncpa [#allocation4], 1
    %s1299 = scalar_lea.sflag [#allocation4], 1
    %1300 = vsyncpa %s1299, 1

// kernel: tpu_custom_call.1
$region0: #{tpu_custom_call.1}
  #allocation0 [shape = 'u32[]', space=smem, size = 0x4, offset = 0x4, fixed_abs, tag = 'smem constant byte address 0x4 - core index']
  #allocation1 [shape = 'u32[72,128]{1,0:T(1,128)}', space=vmem, size = 0x9000, scoped, tag = 'internal scratch']
  %s0 = inlined_call_operand.hbm [shape: f32[512,128], index: 0, kind: input, shape index: {}]
  %s1 = inlined_call_operand.hbm [shape: bf16[128,512], index: 1, kind: input, shape index: {}]
  %s2 = inlined_call_operand.hbm [shape: f32[1,512], index: 2, kind: input, shape index: {}]
  %s3 = inlined_call_operand.hbm [shape: bf16[256,256], index: 3, kind: input, shape index: {}]
  %s4 = inlined_call_operand.vmem [shape: f32[1,256], index: 4, kind: input, shape index: {}]
  %s5 = inlined_call_operand.hbm [shape: f32[512,256], index: 5, kind: output, shape index: {}]
  %s6 = sld [smem:[#allocation0]]
  $region69: #{tpu_custom_call.1} parent=0
    _
  %s8 = ssub.s32 1, %s6
  %s9 = scalar_select 0, %s8, %s6
  $region1: #{tpu_custom_call.1} parent=0
    #allocation2 [shape = 'u8[131072]{0}', space=vmem, size = 0x20000, scoped, tag = 'input window, operand 0']
    #allocation3 [shape = 's32[2]{0}', space=sflag, size = 0x8, scoped, tag = 'scoped memory for tpu_custom_call.1']
    #allocation4 [shape = 's32[2]{0}', space=sflag, size = 0x8, scoped, tag = 'scoped memory for tpu_custom_call.1']
    #allocation5 [shape = 'u8[131072]{0}', space=vmem, size = 0x20000, scoped, tag = 'input window, operand 1, single buffered']
    #allocation6 [shape = 's32[1]{0}', space=sflag, size = 0x4, scoped, tag = 'scoped memory for tpu_custom_call.1']
    #allocation7 [shape = 'u8[2048]{0}', space=vmem, size = 0x800, scoped, tag = 'input window, operand 2, single buffered']
    #allocation8 [shape = 'u8[131072]{0}', space=vmem, size = 0x20000, scoped, tag = 'input window, operand 3, single buffered']
    #allocation9 [shape = 's32[1]{0}', space=sflag, size = 0x4, scoped, tag = 'scoped memory for tpu_custom_call.1']
    #allocation10 [shape = 'u8[262144]{0}', space=vmem, size = 0x40000, scoped, tag = 'output window, operand 0']
    %10 = vsyncpa [#allocation3], 0
    %s11 = scalar_lea.sflag [#allocation3], 1
    %12 = vsyncpa %s11, 0
    %13 = vsyncpa [#allocation6], 0
    %14 = vsyncpa [#allocation9], 0
    %15 = vsyncpa [#allocation4], 0
    %s16 = scalar_lea.sflag [#allocation4], 1
    %17 = vsyncpa %s16, 0
    loop: start=0, step=1, limit=6
    $region2: #{tpu_custom_call.1} parent=1 // loop_pre_header
      _
    $region3: #{tpu_custom_call.1} parent=1 // loop_header
      %s19 = sphi 0, %s23
      %p20 = scmp.ge.s32.totalorder %s19, 6
      %s29 = sphi 0, %s31
      %s32 = sphi 0, %s29
      %s33 = sphi 0, %s32
      %s49 = sphi 0, %s33
      %s53 = sphi 0, %s53
      %s55 = sphi 0, %s53
      %s56 = sphi 0, %s55
      %s70 = sphi 0, %s56
      %s74 = sphi 0, %s74
      %s76 = sphi 0, %s74
      %s77 = sphi 0, %s76
      %s91 = sphi 0, %s77
      %s95 = sphi 0, %s95
      %s97 = sphi 0, %s95
      %s98 = sphi 0, %s97
      %s112 = sphi 0, %s98
      %s116 = sphi 0, %s116
      %s118 = sphi 0, %s116
      %s119 = sphi 0, %s118
      %s133 = sphi 0, %s119
      %s139 = sphi 0, %s141
      %s142 = sphi 0, %s139
      %s143 = sphi 0, %s142
      %s159 = sphi 0, %s143
    $region4: #{tpu_custom_call.1} parent=1 // loop_header_branch
      %22 = sbr.rel (%p20) target = $region8
    $region5: #{tpu_custom_call.1} parent=1 // loop_body
      %s24 = ssub.s32 %s19, 1
      %s25 = ssub.s32 %s19, 2
      %s26 = sadd.s32 %s19, 1
      %s27 = ssub.s32 %s19, %s26
      %p28 = scmp.eq.s32.totalorder %s27, 0
      %s30 = sadd.s32 %s29, 1
      %s31 = scalar_select %p28, %s29, %s30
      %p34 = pneg %p28
      %p35 = scmp.eq.s32.totalorder %s19, 3
      %p36 = por %p34, %p35
      %p37 = scmp.ne.s32.totalorder %s29, %s32
      %p38 = scmp.eq.s32.totalorder %s19, 0
      %p39 = por %p37, %p38
      %p40 = scmp.ne.s32.totalorder %s29, %s32
      %p41 = scmp.eq.s32.totalorder %s24, 3
      %p42 = por %p40, %p41
      %p43 = scmp.ne.s32.totalorder %s32, %s33
      %p44 = scmp.eq.s32.totalorder %s24, 0
      %p45 = por %p43, %p44
      %p46 = scmp.ne.s32.totalorder %s32, %s33
      %p47 = scmp.eq.s32.totalorder %s25, 3
      %p48 = por %p46, %p47
      %p50 = scmp.ne.s32.totalorder %s33, %s49
      %p51 = scmp.eq.s32.totalorder %s25, 0
      %p52 = por %p50, %p51
      %s54 = sadd.s32 %s53, 1
      %p57 = scmp.eq.s32.totalorder %s19, 3
      %p58 = scmp.ne.s32.totalorder %s53, %s55
      %p59 = scmp.eq.s32.totalorder %s19, 0
      %p60 = por %p58, %p59
      %p61 = scmp.ne.s32.totalorder %s53, %s55
      %p62 = scmp.eq.s32.totalorder %s24, 3
      %p63 = por %p61, %p62
      %p64 = scmp.ne.s32.totalorder %s55, %s56
      %p65 = scmp.eq.s32.totalorder %s24, 0
      %p66 = por %p64, %p65
      %p67 = scmp.ne.s32.totalorder %s55, %s56
      %p68 = scmp.eq.s32.totalorder %s25, 3
      %p69 = por %p67, %p68
      %p71 = scmp.ne.s32.totalorder %s56, %s70
      %p72 = scmp.eq.s32.totalorder %s25, 0
      %p73 = por %p71, %p72
      %s75 = sadd.s32 %s74, 1
      %p78 = scmp.eq.s32.totalorder %s19, 3
      %p79 = scmp.ne.s32.totalorder %s74, %s76
      %p80 = scmp.eq.s32.totalorder %s19, 0
      %p81 = por %p79, %p80
      %p82 = scmp.ne.s32.totalorder %s74, %s76
      %p83 = scmp.eq.s32.totalorder %s24, 3
      %p84 = por %p82, %p83
      %p85 = scmp.ne.s32.totalorder %s76, %s77
      %p86 = scmp.eq.s32.totalorder %s24, 0
      %p87 = por %p85, %p86
      %p88 = scmp.ne.s32.totalorder %s76, %s77
      %p89 = scmp.eq.s32.totalorder %s25, 3
      %p90 = por %p88, %p89
      %p92 = scmp.ne.s32.totalorder %s77, %s91
      %p93 = scmp.eq.s32.totalorder %s25, 0
      %p94 = por %p92, %p93
      %s96 = sadd.s32 %s95, 1
      %p99 = scmp.eq.s32.totalorder %s19, 3
      %p100 = scmp.ne.s32.totalorder %s95, %s97
      %p101 = scmp.eq.s32.totalorder %s19, 0
      %p102 = por %p100, %p101
      %p103 = scmp.ne.s32.totalorder %s95, %s97
      %p104 = scmp.eq.s32.totalorder %s24, 3
      %p105 = por %p103, %p104
      %p106 = scmp.ne.s32.totalorder %s97, %s98
      %p107 = scmp.eq.s32.totalorder %s24, 0
      %p108 = por %p106, %p107
      %p109 = scmp.ne.s32.totalorder %s97, %s98
      %p110 = scmp.eq.s32.totalorder %s25, 3
      %p111 = por %p109, %p110
      %p113 = scmp.ne.s32.totalorder %s98, %s112
      %p114 = scmp.eq.s32.totalorder %s25, 0
      %p115 = por %p113, %p114
      %s117 = sadd.s32 %s116, 1
      %p120 = scmp.eq.s32.totalorder %s19, 3
      %p121 = scmp.ne.s32.totalorder %s116, %s118
      %p122 = scmp.eq.s32.totalorder %s19, 0
      %p123 = por %p121, %p122
      %p124 = scmp.ne.s32.totalorder %s116, %s118
      %p125 = scmp.eq.s32.totalorder %s24, 3
      %p126 = por %p124, %p125
      %p127 = scmp.ne.s32.totalorder %s118, %s119
      %p128 = scmp.eq.s32.totalorder %s24, 0
      %p129 = por %p127, %p128
      %p130 = scmp.ne.s32.totalorder %s118, %s119
      %p131 = scmp.eq.s32.totalorder %s25, 3
      %p132 = por %p130, %p131
      %p134 = scmp.ne.s32.totalorder %s119, %s133
      %p135 = scmp.eq.s32.totalorder %s25, 0
      %p136 = por %p134, %p135
      %s137 = ssub.s32 %s19, %s26
      %p138 = scmp.eq.s32.totalorder %s137, 0
      %s140 = sadd.s32 %s139, 1
      %s141 = scalar_select %p138, %s139, %s140
      %p144 = pneg %p138
      %p145 = scmp.eq.s32.totalorder %s19, 3
      %p146 = por %p144, %p145
      %p147 = scmp.ne.s32.totalorder %s139, %s142
      %p148 = scmp.eq.s32.totalorder %s19, 0
      %p149 = por %p147, %p148
      %p150 = scmp.ne.s32.totalorder %s139, %s142
      %p151 = scmp.eq.s32.totalorder %s24, 3
      %p152 = por %p150, %p151
      %p153 = scmp.ne.s32.totalorder %s142, %s143
      %p154 = scmp.eq.s32.totalorder %s24, 0
      %p155 = por %p153, %p154
      %p156 = scmp.ne.s32.totalorder %s142, %s143
      %p157 = scmp.eq.s32.totalorder %s25, 3
      %p158 = por %p156, %p157
      %p160 = scmp.ne.s32.totalorder %s143, %s159
      %p161 = scmp.eq.s32.totalorder %s25, 0
      %p162 = por %p160, %p161
      %p163 = scmp.le.s32.totalorder 1, %s19
      %p164 = scmp.lt.s32.totalorder %s19, 5
      %p165 = pnand %p163, %p164
      %p166 = pneg %p165
      // Predicated region
      $region9: #{tpu_custom_call.1} parent=5 // pred_check
        _
      $region10: #{tpu_custom_call.1} parent=5 // pred_check_branch
        %168 = sbr.rel (%p165) target = $region12
      $region11: #{tpu_custom_call.1} parent=5 // pred_region
        %s169 = ssub.s32 %s19, 1
        // Predicated region
        $region13: #{tpu_custom_call.1} parent=11 // pred_check
          %p170 = pneg %p66
        $region14: #{tpu_custom_call.1} parent=11 // pred_check_branch
          %172 = sbr.rel (%p170) target = $region16
        $region15: #{tpu_custom_call.1} parent=11 // pred_region
          %174 = vsyncadd [#allocation6], 0
          %s175 = sshll.u32 %s1, 4
          %s176 = int_to_ptr.hbm [resolvable:$true] %s175
          %s177 = sshll.u32 [#allocation5], 4
          %s178 = int_to_ptr.vmem [resolvable:$true] %s177
          %183 = dma.hbm_to_vmem [thread:$0]  %s176, 4096, %s178, [#allocation6], 256, 256, 16
        $region16: #{tpu_custom_call.1} parent=11 // pred_fallthru
          _
        // Predicated region
        $region17: #{tpu_custom_call.1} parent=11 // pred_check
          %p184 = pneg %p87
        $region18: #{tpu_custom_call.1} parent=11 // pred_check_branch
          %186 = sbr.rel (%p184) target = $region20
        $region19: #{tpu_custom_call.1} parent=11 // pred_region
          %188 = vsyncadd [#allocation6], 0
          %s190 = sshll.u32 %s2, 4
          %s191 = int_to_ptr.hbm [resolvable:$true] %s190
          %s192 = sshll.u32 [#allocation7], 4
          %s193 = int_to_ptr.vmem [resolvable:$true] %s192
          %195 = dma.hbm_to_vmem [thread:$0]  %s191, 64, %s193, [#allocation6]
        $region20: #{tpu_custom_call.1} parent=11 // pred_fallthru
          _
        // Predicated region
        $region21: #{tpu_custom_call.1} parent=11 // pred_check
          %p196 = pneg %p108
        $region22: #{tpu_custom_call.1} parent=11 // pred_check_branch
          %198 = sbr.rel (%p196) target = $region24
        $region23: #{tpu_custom_call.1} parent=11 // pred_region
          %200 = vsyncadd [#allocation9], 0
          %s201 = sshll.u32 %s3, 4
          %s202 = int_to_ptr.hbm [resolvable:$true] %s201
          %s203 = sshll.u32 [#allocation8], 4
          %s204 = int_to_ptr.vmem [resolvable:$true] %s203
          %209 = dma.hbm_to_vmem [thread:$0]  %s202, 4096, %s204, [#allocation9], 128, 128, 8
        $region24: #{tpu_custom_call.1} parent=11 // pred_fallthru
          _
        // Predicated region
        $region25: #{tpu_custom_call.1} parent=11 // pred_check
          %p210 = pneg %p129
        $region26: #{tpu_custom_call.1} parent=11 // pred_check_branch
          %212 = sbr.rel (%p210) target = $region28
        $region27: #{tpu_custom_call.1} parent=11 // pred_region
          _
        $region28: #{tpu_custom_call.1} parent=11 // pred_fallthru
          _
      $region12: #{tpu_custom_call.1} parent=5 // pred_fallthru
        _
      %p213 = scmp.lt.s32.totalorder %s19, 4
      // Predicated region
      $region29: #{tpu_custom_call.1} parent=5 // pred_check
        %p214 = pneg %p213
      $region30: #{tpu_custom_call.1} parent=5 // pred_check_branch
        %216 = sbr.rel (%p214) target = $region32
      $region31: #{tpu_custom_call.1} parent=5 // pred_region
        // Predicated region
        $region33: #{tpu_custom_call.1} parent=31 // pred_check
          %p217 = pneg %p39
        $region34: #{tpu_custom_call.1} parent=31 // pred_check_branch
          %219 = sbr.rel (%p217) target = $region36
        $region35: #{tpu_custom_call.1} parent=31 // pred_region
          %s220 = sand.u32 %s29, 1
          %s221 = scalar_lea.sflag [#allocation3], %s220
          %s222 = sand.u32 %s29, 1
          %s223 = smul.addr %s222, 128
          %s224 = scalar_lea.vmem [#allocation2], %s223
          %s225 = smul.u32 16, %s19
          %227 = vsyncadd %s221, 0
          %s228 = smul.addr %s225, 8
          %s229 = scalar_lea.hbm %s0, %s228
          %s230 = sshll.u32 %s229, 4
          %s231 = int_to_ptr.hbm [resolvable:$true] %s230
          %s232 = sshll.u32 %s224, 4
          %s233 = int_to_ptr.vmem [resolvable:$true] %s232
          %238 = dma.hbm_to_vmem [thread:$0]  %s231, 2048, %s233, %s221, 128, 128, 8
        $region36: #{tpu_custom_call.1} parent=31 // pred_fallthru
          _
      $region32: #{tpu_custom_call.1} parent=5 // pred_fallthru
        _
      %p239 = scmp.le.s32.totalorder 1, %s19
      %p240 = scmp.lt.s32.totalorder %s19, 5
      %p241 = pnand %p239, %p240
      %p242 = pneg %p241
      // Predicated region
      $region37: #{tpu_custom_call.1} parent=5 // pred_check
        _
      $region38: #{tpu_custom_call.1} parent=5 // pred_check_branch
        %244 = sbr.rel (%p241) target = $region40
      $region39: #{tpu_custom_call.1} parent=5 // pred_region
        %s245 = ssub.s32 %s19, 1
        %s246 = sand.u32 %s32, 1
        %s247 = scalar_lea.sflag [#allocation3], %s246
        %s248 = sand.u32 %s32, 1
        %s249 = smul.addr %s248, 128
        %s250 = scalar_lea.vmem [#allocation2], %s249
        // Predicated region
        $region41: #{tpu_custom_call.1} parent=39 // pred_check
          %p251 = pneg %p45
        $region42: #{tpu_custom_call.1} parent=39 // pred_check_branch
          %253 = sbr.rel (%p251) target = $region44
        $region43: #{tpu_custom_call.1} parent=39 // pred_region
          %255 = dma.done %s247, 2048
        $region44: #{tpu_custom_call.1} parent=39 // pred_fallthru
          _
        // Predicated region
        $region45: #{tpu_custom_call.1} parent=39 // pred_check
          %p256 = pneg %p66
        $region46: #{tpu_custom_call.1} parent=39 // pred_check_branch
          %258 = sbr.rel (%p256) target = $region48
        $region47: #{tpu_custom_call.1} parent=39 // pred_region
          %260 = dma.done [#allocation6], 4096
        $region48: #{tpu_custom_call.1} parent=39 // pred_fallthru
          _
        // Predicated region
        $region49: #{tpu_custom_call.1} parent=39 // pred_check
          %p261 = pneg %p87
        $region50: #{tpu_custom_call.1} parent=39 // pred_check_branch
          %263 = sbr.rel (%p261) target = $region52
        $region51: #{tpu_custom_call.1} parent=39 // pred_region
          %265 = dma.done [#allocation6], 64
        $region52: #{tpu_custom_call.1} parent=39 // pred_fallthru
          _
        // Predicated region
        $region53: #{tpu_custom_call.1} parent=39 // pred_check
          %p266 = pneg %p108
        $region54: #{tpu_custom_call.1} parent=39 // pred_check_branch
          %268 = sbr.rel (%p266) target = $region56
        $region55: #{tpu_custom_call.1} parent=39 // pred_region
          %270 = dma.done [#allocation9], 4096
        $region56: #{tpu_custom_call.1} parent=39 // pred_fallthru
          _
        %s271 = sand.u32 %s32, 1
        %s272 = scalar_lea.sflag [#allocation3], %s271
        %s273 = sand.u32 %s32, 1
        %s274 = smul.addr %s273, 128
        %s275 = scalar_lea.vmem [#allocation2], %s274
        %p276 = pneg %p45
        %p277 = pneg %p42
        %p278 = pneg %p66
        %p279 = pneg %p63
        %p280 = pneg %p87
        %p281 = pneg %p84
        %p282 = pneg %p108
        %p283 = pneg %p105
        %p284 = pneg %p129
        %p285 = pneg %p126
        %p286 = pneg %p155
        %p287 = pneg %p152
        %s288 = sand.u32 %s142, 1
        %s289 = scalar_lea.sflag [#allocation4], %s288
        %s290 = sand.u32 %s142, 1
        %s291 = smul.addr %s290, 256
        %s292 = scalar_lea.vmem [#allocation10], %s291
        %s293 = smul.u32 16, %s24
        %s294 = smul.u32 16, %s24
        %v295 = vld [vmem:[%s250] sm:$0xff]
        %v296 = vld [vmem:[%s250 + $0x8] sm:$0xff]
        %v297 = vld [vmem:[%s250 + $0x10] sm:$0xff]
        %v298 = vld [vmem:[%s250 + $0x18] sm:$0xff]
        %v299 = vld [vmem:[%s250 + $0x20] sm:$0xff]
        %v300 = vld [vmem:[%s250 + $0x28] sm:$0xff]
        %v301 = vld [vmem:[%s250 + $0x30] sm:$0xff]
        %v302 = vld [vmem:[%s250 + $0x38] sm:$0xff]
        %v303 = vld [vmem:[%s250 + $0x40] sm:$0xff]
        %v304 = vld [vmem:[%s250 + $0x48] sm:$0xff]
        %v305 = vld [vmem:[%s250 + $0x50] sm:$0xff]
        %v306 = vld [vmem:[%s250 + $0x58] sm:$0xff]
        %v307 = vld [vmem:[%s250 + $0x60] sm:$0xff]
        %v308 = vld [vmem:[%s250 + $0x68] sm:$0xff]
        %v309 = vld [vmem:[%s250 + $0x70] sm:$0xff]
        %v310 = vld [vmem:[%s250 + $0x78] sm:$0xff]
        %v311 = vpack.c.bf16 %v296, %v295
        %v312 = vpack.c.bf16 %v298, %v297
        %v313 = vpack.c.bf16 %v300, %v299
        %v314 = vpack.c.bf16 %v302, %v301
        %v315 = vpack.c.bf16 %v304, %v303
        %v316 = vpack.c.bf16 %v306, %v305
        %v317 = vpack.c.bf16 %v308, %v307
        %v318 = vpack.c.bf16 %v310, %v309
        %v319 = vld [vmem:[#allocation5] sm:$0xff]
        %v320 = vld [vmem:[#allocation5 + $0x8] sm:$0xff]
        %v321 = vld [vmem:[#allocation5 + $0x10] sm:$0xff]
        %v322 = vld [vmem:[#allocation5 + $0x18] sm:$0xff]
        %v323 = vld [vmem:[#allocation5 + $0x20] sm:$0xff]
        %v324 = vld [vmem:[#allocation5 + $0x28] sm:$0xff]
        %v325 = vld [vmem:[#allocation5 + $0x30] sm:$0xff]
        %v326 = vld [vmem:[#allocation5 + $0x38] sm:$0xff]
        %v327 = vld [vmem:[#allocation5 + $0x40] sm:$0xff]
        %v328 = vld [vmem:[#allocation5 + $0x48] sm:$0xff]
        %v329 = vld [vmem:[#allocation5 + $0x50] sm:$0xff]
        %v330 = vld [vmem:[#allocation5 + $0x58] sm:$0xff]
        %v331 = vld [vmem:[#allocation5 + $0x60] sm:$0xff]
        %v332 = vld [vmem:[#allocation5 + $0x68] sm:$0xff]
        %v333 = vld [vmem:[#allocation5 + $0x70] sm:$0xff]
        %v334 = vld [vmem:[#allocation5 + $0x78] sm:$0xff]
        %v335 = vld [vmem:[#allocation5 + $0x80] sm:$0xff]
        %v336 = vld [vmem:[#allocation5 + $0x88] sm:$0xff]
        %v337 = vld [vmem:[#allocation5 + $0x90] sm:$0xff]
        %v338 = vld [vmem:[#allocation5 + $0x98] sm:$0xff]
        %v339 = vld [vmem:[#allocation5 + $0xa0] sm:$0xff]
        %v340 = vld [vmem:[#allocation5 + $0xa8] sm:$0xff]
        %v341 = vld [vmem:[#allocation5 + $0xb0] sm:$0xff]
        %v342 = vld [vmem:[#allocation5 + $0xb8] sm:$0xff]
        %v343 = vld [vmem:[#allocation5 + $0xc0] sm:$0xff]
        %v344 = vld [vmem:[#allocation5 + $0xc8] sm:$0xff]
        %v345 = vld [vmem:[#allocation5 + $0xd0] sm:$0xff]
        %v346 = vld [vmem:[#allocation5 + $0xd8] sm:$0xff]
        %v347 = vld [vmem:[#allocation5 + $0xe0] sm:$0xff]
        %v348 = vld [vmem:[#allocation5 + $0xe8] sm:$0xff]
        %v349 = vld [vmem:[#allocation5 + $0xf0] sm:$0xff]
        %v350 = vld [vmem:[#allocation5 + $0xf8] sm:$0xff]
        %v351 = vld [vmem:[#allocation7] sm:$0xf]
        %v353 = vperm.slane %v351, 0
        %v354 = vperm.slane %v351, 1
        %v355 = vperm.slane %v351, 2
        %v356 = vperm.slane %v351, 3
        %v393 = vunpack.c.l.b16 %v319
        %v394 = vunpack.c.h.b16 %v319
        %v395 = vunpack.c.l.b16 %v320
        %v396 = vunpack.c.h.b16 %v320
        %v397 = vunpack.c.l.b16 %v321
        %v398 = vunpack.c.h.b16 %v321
        %v399 = vunpack.c.l.b16 %v322
        %v400 = vunpack.c.h.b16 %v322
        %v401 = vunpack.c.l.b16 %v323
        %v402 = vunpack.c.h.b16 %v323
        %v403 = vunpack.c.l.b16 %v324
        %v404 = vunpack.c.h.b16 %v324
        %v405 = vunpack.c.l.b16 %v325
        %v406 = vunpack.c.h.b16 %v325
        %v407 = vunpack.c.l.b16 %v326
        %v408 = vunpack.c.h.b16 %v326
        %v409 = vunpack.c.l.b16 %v327
        %v410 = vunpack.c.h.b16 %v327
        %v411 = vunpack.c.l.b16 %v328
        %v412 = vunpack.c.h.b16 %v328
        %v413 = vunpack.c.l.b16 %v329
        %v414 = vunpack.c.h.b16 %v329
        %v415 = vunpack.c.l.b16 %v330
        %v416 = vunpack.c.h.b16 %v330
        %v417 = vunpack.c.l.b16 %v331
        %v418 = vunpack.c.h.b16 %v331
        %v419 = vunpack.c.l.b16 %v332
        %v420 = vunpack.c.h.b16 %v332
        %v421 = vunpack.c.l.b16 %v333
        %v422 = vunpack.c.h.b16 %v333
        %v423 = vunpack.c.l.b16 %v334
        %v424 = vunpack.c.h.b16 %v334
        %v425 = vunpack.c.l.b16 %v335
        %v426 = vunpack.c.h.b16 %v335
        %v427 = vunpack.c.l.b16 %v336
        %v428 = vunpack.c.h.b16 %v336
        %v429 = vunpack.c.l.b16 %v337
        %v430 = vunpack.c.h.b16 %v337
        %v431 = vunpack.c.l.b16 %v338
        %v432 = vunpack.c.h.b16 %v338
        %v433 = vunpack.c.l.b16 %v339
        %v434 = vunpack.c.h.b16 %v339
        %v435 = vunpack.c.l.b16 %v340
        %v436 = vunpack.c.h.b16 %v340
        %v437 = vunpack.c.l.b16 %v341
        %v438 = vunpack.c.h.b16 %v341
        %v439 = vunpack.c.l.b16 %v342
        %v440 = vunpack.c.h.b16 %v342
        %v441 = vunpack.c.l.b16 %v343
        %v442 = vunpack.c.h.b16 %v343
        %v443 = vunpack.c.l.b16 %v344
        %v444 = vunpack.c.h.b16 %v344
        %v445 = vunpack.c.l.b16 %v345
        %v446 = vunpack.c.h.b16 %v345
        %v447 = vunpack.c.l.b16 %v346
        %v448 = vunpack.c.h.b16 %v346
        %v449 = vunpack.c.l.b16 %v347
        %v450 = vunpack.c.h.b16 %v347
        %v451 = vunpack.c.l.b16 %v348
        %v452 = vunpack.c.h.b16 %v348
        %v453 = vunpack.c.l.b16 %v349
        %v454 = vunpack.c.h.b16 %v349
        %v455 = vunpack.c.l.b16 %v350
        %v456 = vunpack.c.h.b16 %v350
        %v457 = vpack.c.b16 %v397, %v393
        %v458 = vpack.c.b16 %v398, %v394
        %v459 = vpack.c.b16 %v399, %v395
        %v460 = vpack.c.b16 %v400, %v396
        %v461 = vpack.c.b16 %v405, %v401
        %v462 = vpack.c.b16 %v406, %v402
        %v463 = vpack.c.b16 %v407, %v403
        %v464 = vpack.c.b16 %v408, %v404
        %v465 = vpack.c.b16 %v413, %v409
        %v466 = vpack.c.b16 %v414, %v410
        %v467 = vpack.c.b16 %v415, %v411
        %v468 = vpack.c.b16 %v416, %v412
        %v469 = vpack.c.b16 %v421, %v417
        %v470 = vpack.c.b16 %v422, %v418
        %v471 = vpack.c.b16 %v423, %v419
        %v472 = vpack.c.b16 %v424, %v420
        %v473 = vpack.c.b16 %v429, %v425
        %v474 = vpack.c.b16 %v430, %v426
        %v475 = vpack.c.b16 %v431, %v427
        %v476 = vpack.c.b16 %v432, %v428
        %v477 = vpack.c.b16 %v437, %v433
        %v478 = vpack.c.b16 %v438, %v434
        %v479 = vpack.c.b16 %v439, %v435
        %v480 = vpack.c.b16 %v440, %v436
        %v481 = vpack.c.b16 %v445, %v441
        %v482 = vpack.c.b16 %v446, %v442
        %v483 = vpack.c.b16 %v447, %v443
        %v484 = vpack.c.b16 %v448, %v444
        %v485 = vpack.c.b16 %v453, %v449
        %v486 = vpack.c.b16 %v454, %v450
        %v487 = vpack.c.b16 %v455, %v451
        %v488 = vpack.c.b16 %v456, %v452
        %521 = vmatpush.bf16.msra.mxu0 %v485
        %522 = vmatpush.bf16.msra.mxu0 %v481
        %523 = vmatpush.bf16.msra.mxu0 %v477
        %524 = vmatpush.bf16.msra.mxu0 %v473
        %525 = vmatpush.bf16.msra.mxu0 %v469
        %526 = vmatpush.bf16.msra.mxu0 %v465
        %527 = vmatpush.bf16.msra.mxu0 %v461
        %528 = vmatpush.bf16.msra.mxu0 %v457
        %529 = vmatmul.bf16.gmra.mxu0 %v311
        %v530 = vpop.f32.mrf.mxu0
        %v531 = vadd.f32 %v353, %v530
        %v532 = vpop.f32.mrf.mxu0
        %v533 = vadd.f32 %v353, %v532
        %534 = vmatmul.bf16.gmra.mxu0 %v312
        %v535 = vpop.f32.mrf.mxu0
        %v536 = vadd.f32 %v353, %v535
        %v537 = vpop.f32.mrf.mxu0
        %v538 = vadd.f32 %v353, %v537
        %539 = vmatmul.bf16.gmra.mxu0 %v313
        %v540 = vpop.f32.mrf.mxu0
        %v541 = vadd.f32 %v353, %v540
        %v542 = vpop.f32.mrf.mxu0
        %v543 = vadd.f32 %v353, %v542
        %544 = vmatmul.bf16.gmra.mxu0 %v314
        %v545 = vpop.f32.mrf.mxu0
        %v546 = vadd.f32 %v353, %v545
        %v547 = vpop.f32.mrf.mxu0
        %v548 = vadd.f32 %v353, %v547
        %549 = vmatmul.bf16.gmra.mxu0 %v315
        %v550 = vpop.f32.mrf.mxu0
        %v551 = vadd.f32 %v353, %v550
        %v552 = vpop.f32.mrf.mxu0
        %v553 = vadd.f32 %v353, %v552
        %554 = vmatmul.bf16.gmra.mxu0 %v316
        %v555 = vpop.f32.mrf.mxu0
        %v556 = vadd.f32 %v353, %v555
        %v557 = vpop.f32.mrf.mxu0
        %v558 = vadd.f32 %v353, %v557
        %559 = vmatmul.bf16.gmra.mxu0 %v317
        %v560 = vpop.f32.mrf.mxu0
        %v561 = vadd.f32 %v353, %v560
        %v562 = vpop.f32.mrf.mxu0
        %v563 = vadd.f32 %v353, %v562
        %564 = vmatmul.bf16.gmra.mxu0 %v318
        %v565 = vpop.f32.mrf.mxu0
        %v566 = vadd.f32 %v353, %v565
        %v567 = vpop.f32.mrf.mxu0
        %v568 = vadd.f32 %v353, %v567
        %569 = vdwg.mxu0
        %570 = vmatpush.bf16.msra.mxu0 %v486
        %571 = vmatpush.bf16.msra.mxu0 %v482
        %572 = vmatpush.bf16.msra.mxu0 %v478
        %573 = vmatpush.bf16.msra.mxu0 %v474
        %574 = vmatpush.bf16.msra.mxu0 %v470
        %575 = vmatpush.bf16.msra.mxu0 %v466
        %576 = vmatpush.bf16.msra.mxu0 %v462
        %577 = vmatpush.bf16.msra.mxu0 %v458
        %578 = vmatmul.bf16.gmra.mxu0 %v311
        %v579 = vpop.f32.mrf.mxu0
        %v580 = vadd.f32 %v354, %v579
        %v581 = vpop.f32.mrf.mxu0
        %v582 = vadd.f32 %v354, %v581
        %583 = vmatmul.bf16.gmra.mxu0 %v312
        %v584 = vpop.f32.mrf.mxu0
        %v585 = vadd.f32 %v354, %v584
        %v586 = vpop.f32.mrf.mxu0
        %v587 = vadd.f32 %v354, %v586
        %588 = vmatmul.bf16.gmra.mxu0 %v313
        %v589 = vpop.f32.mrf.mxu0
        %v590 = vadd.f32 %v354, %v589
        %v591 = vpop.f32.mrf.mxu0
        %v592 = vadd.f32 %v354, %v591
        %593 = vmatmul.bf16.gmra.mxu0 %v314
        %v594 = vpop.f32.mrf.mxu0
        %v595 = vadd.f32 %v354, %v594
        %v596 = vpop.f32.mrf.mxu0
        %v597 = vadd.f32 %v354, %v596
        %598 = vmatmul.bf16.gmra.mxu0 %v315
        %v599 = vpop.f32.mrf.mxu0
        %v600 = vadd.f32 %v354, %v599
        %v601 = vpop.f32.mrf.mxu0
        %v602 = vadd.f32 %v354, %v601
        %603 = vmatmul.bf16.gmra.mxu0 %v316
        %v604 = vpop.f32.mrf.mxu0
        %v605 = vadd.f32 %v354, %v604
        %v606 = vpop.f32.mrf.mxu0
        %v607 = vadd.f32 %v354, %v606
        %608 = vmatmul.bf16.gmra.mxu0 %v317
        %v609 = vpop.f32.mrf.mxu0
        %v610 = vadd.f32 %v354, %v609
        %v611 = vpop.f32.mrf.mxu0
        %v612 = vadd.f32 %v354, %v611
        %613 = vmatmul.bf16.gmra.mxu0 %v318
        %v614 = vpop.f32.mrf.mxu0
        %v615 = vadd.f32 %v354, %v614
        %v616 = vpop.f32.mrf.mxu0
        %v617 = vadd.f32 %v354, %v616
        %618 = vdwg.mxu0
        %619 = vmatpush.bf16.msra.mxu0 %v487
        %620 = vmatpush.bf16.msra.mxu0 %v483
        %621 = vmatpush.bf16.msra.mxu0 %v479
        %622 = vmatpush.bf16.msra.mxu0 %v475
        %623 = vmatpush.bf16.msra.mxu0 %v471
        %624 = vmatpush.bf16.msra.mxu0 %v467
        %625 = vmatpush.bf16.msra.mxu0 %v463
        %626 = vmatpush.bf16.msra.mxu0 %v459
        %627 = vmatmul.bf16.gmra.mxu0 %v311
        %v628 = vpop.f32.mrf.mxu0
        %v629 = vadd.f32 %v355, %v628
        %v630 = vpop.f32.mrf.mxu0
        %v631 = vadd.f32 %v355, %v630
        %632 = vmatmul.bf16.gmra.mxu0 %v312
        %v633 = vpop.f32.mrf.mxu0
        %v634 = vadd.f32 %v355, %v633
        %v635 = vpop.f32.mrf.mxu0
        %v636 = vadd.f32 %v355, %v635
        %637 = vmatmul.bf16.gmra.mxu0 %v313
        %v638 = vpop.f32.mrf.mxu0
        %v639 = vadd.f32 %v355, %v638
        %v640 = vpop.f32.mrf.mxu0
        %v641 = vadd.f32 %v355, %v640
        %642 = vmatmul.bf16.gmra.mxu0 %v314
        %v643 = vpop.f32.mrf.mxu0
        %v644 = vadd.f32 %v355, %v643
        %v645 = vpop.f32.mrf.mxu0
        %v646 = vadd.f32 %v355, %v645
        %647 = vmatmul.bf16.gmra.mxu0 %v315
        %v648 = vpop.f32.mrf.mxu0
        %v649 = vadd.f32 %v355, %v648
        %v650 = vpop.f32.mrf.mxu0
        %v651 = vadd.f32 %v355, %v650
        %652 = vmatmul.bf16.gmra.mxu0 %v316
        %v653 = vpop.f32.mrf.mxu0
        %v654 = vadd.f32 %v355, %v653
        %v655 = vpop.f32.mrf.mxu0
        %v656 = vadd.f32 %v355, %v655
        %657 = vmatmul.bf16.gmra.mxu0 %v317
        %v658 = vpop.f32.mrf.mxu0
        %v659 = vadd.f32 %v355, %v658
        %v660 = vpop.f32.mrf.mxu0
        %v661 = vadd.f32 %v355, %v660
        %662 = vmatmul.bf16.gmra.mxu0 %v318
        %v663 = vpop.f32.mrf.mxu0
        %v664 = vadd.f32 %v355, %v663
        %v665 = vpop.f32.mrf.mxu0
        %v666 = vadd.f32 %v355, %v665
        %667 = vdwg.mxu0
        %668 = vmatpush.bf16.msra.mxu0 %v488
        %669 = vmatpush.bf16.msra.mxu0 %v484
        %670 = vmatpush.bf16.msra.mxu0 %v480
        %671 = vmatpush.bf16.msra.mxu0 %v476
        %672 = vmatpush.bf16.msra.mxu0 %v472
        %673 = vmatpush.bf16.msra.mxu0 %v468
        %674 = vmatpush.bf16.msra.mxu0 %v464
        %675 = vmatpush.bf16.msra.mxu0 %v460
        %676 = vmatmul.bf16.gmra.mxu0 %v311
        %v677 = vpop.f32.mrf.mxu0
        %v678 = vadd.f32 %v356, %v677
        %v679 = vpop.f32.mrf.mxu0
        %v680 = vadd.f32 %v356, %v679
        %681 = vmatmul.bf16.gmra.mxu0 %v312
        %v682 = vpop.f32.mrf.mxu0
        %v683 = vadd.f32 %v356, %v682
        %v684 = vpop.f32.mrf.mxu0
        %v685 = vadd.f32 %v356, %v684
        %686 = vmatmul.bf16.gmra.mxu0 %v313
        %v687 = vpop.f32.mrf.mxu0
        %v688 = vadd.f32 %v356, %v687
        %v689 = vpop.f32.mrf.mxu0
        %v690 = vadd.f32 %v356, %v689
        %691 = vmatmul.bf16.gmra.mxu0 %v314
        %v692 = vpop.f32.mrf.mxu0
        %v693 = vadd.f32 %v356, %v692
        %v694 = vpop.f32.mrf.mxu0
        %v695 = vadd.f32 %v356, %v694
        %696 = vmatmul.bf16.gmra.mxu0 %v315
        %v697 = vpop.f32.mrf.mxu0
        %v698 = vadd.f32 %v356, %v697
        %v699 = vpop.f32.mrf.mxu0
        %v700 = vadd.f32 %v356, %v699
        %701 = vmatmul.bf16.gmra.mxu0 %v316
        %v702 = vpop.f32.mrf.mxu0
        %v703 = vadd.f32 %v356, %v702
        %v704 = vpop.f32.mrf.mxu0
        %v705 = vadd.f32 %v356, %v704
        %706 = vmatmul.bf16.gmra.mxu0 %v317
        %v707 = vpop.f32.mrf.mxu0
        %v708 = vadd.f32 %v356, %v707
        %v709 = vpop.f32.mrf.mxu0
        %v710 = vadd.f32 %v356, %v709
        %711 = vmatmul.bf16.gmra.mxu0 %v318
        %v712 = vpop.f32.mrf.mxu0
        %v713 = vadd.f32 %v356, %v712
        %v714 = vpop.f32.mrf.mxu0
        %v715 = vadd.f32 %v356, %v714
        %716 = vdwg.mxu0
        %v717 = vmax.f32 %v531, 0.0
        %v718 = vmax.f32 %v580, 0.0
        %v719 = vmax.f32 %v533, 0.0
        %v720 = vmax.f32 %v582, 0.0
        %v721 = vmax.f32 %v536, 0.0
        %v722 = vmax.f32 %v585, 0.0
        %v723 = vmax.f32 %v538, 0.0
        %v724 = vmax.f32 %v587, 0.0
        %v725 = vmax.f32 %v541, 0.0
        %v726 = vmax.f32 %v590, 0.0
        %v727 = vmax.f32 %v543, 0.0
        %v728 = vmax.f32 %v592, 0.0
        %v729 = vmax.f32 %v546, 0.0
        %v730 = vmax.f32 %v595, 0.0
        %v731 = vmax.f32 %v548, 0.0
        %v732 = vmax.f32 %v597, 0.0
        %v733 = vmax.f32 %v551, 0.0
        %v734 = vmax.f32 %v600, 0.0
        %v735 = vmax.f32 %v553, 0.0
        %v736 = vmax.f32 %v602, 0.0
        %v737 = vmax.f32 %v556, 0.0
        %v738 = vmax.f32 %v605, 0.0
        %v739 = vmax.f32 %v558, 0.0
        %v740 = vmax.f32 %v607, 0.0
        %v741 = vmax.f32 %v561, 0.0
        %v742 = vmax.f32 %v610, 0.0
        %v743 = vmax.f32 %v563, 0.0
        %v744 = vmax.f32 %v612, 0.0
        %v745 = vmax.f32 %v566, 0.0
        %v746 = vmax.f32 %v615, 0.0
        %v747 = vmax.f32 %v568, 0.0
        %v748 = vmax.f32 %v617, 0.0
        %v749 = vpack.c.bf16 %v719, %v717
        %v750 = vpack.c.bf16 %v720, %v718
        %v751 = vpack.c.bf16 %v723, %v721
        %v752 = vpack.c.bf16 %v724, %v722
        %v753 = vpack.c.bf16 %v727, %v725
        %v754 = vpack.c.bf16 %v728, %v726
        %v755 = vpack.c.bf16 %v731, %v729
        %v756 = vpack.c.bf16 %v732, %v730
        %v757 = vpack.c.bf16 %v735, %v733
        %v758 = vpack.c.bf16 %v736, %v734
        %v759 = vpack.c.bf16 %v739, %v737
        %v760 = vpack.c.bf16 %v740, %v738
        %v761 = vpack.c.bf16 %v743, %v741
        %v762 = vpack.c.bf16 %v744, %v742
        %v763 = vpack.c.bf16 %v747, %v745
        %v764 = vpack.c.bf16 %v748, %v746
        %v765 = vld [vmem:[#allocation8] sm:$0xff]
        %v766 = vld [vmem:[#allocation8 + $0x8] sm:$0xff]
        %v767 = vld [vmem:[#allocation8 + $0x10] sm:$0xff]
        %v768 = vld [vmem:[#allocation8 + $0x18] sm:$0xff]
        %v769 = vld [vmem:[#allocation8 + $0x20] sm:$0xff]
        %v770 = vld [vmem:[#allocation8 + $0x28] sm:$0xff]
        %v771 = vld [vmem:[#allocation8 + $0x30] sm:$0xff]
        %v772 = vld [vmem:[#allocation8 + $0x38] sm:$0xff]
        %v773 = vld [vmem:[#allocation8 + $0x40] sm:$0xff]
        %v774 = vld [vmem:[#allocation8 + $0x48] sm:$0xff]
        %v775 = vld [vmem:[#allocation8 + $0x50] sm:$0xff]
        %v776 = vld [vmem:[#allocation8 + $0x58] sm:$0xff]
        %v777 = vld [vmem:[#allocation8 + $0x60] sm:$0xff]
        %v778 = vld [vmem:[#allocation8 + $0x68] sm:$0xff]
        %v779 = vld [vmem:[#allocation8 + $0x70] sm:$0xff]
        %v780 = vld [vmem:[#allocation8 + $0x78] sm:$0xff]
        %v781 = vld [vmem:[#allocation8 + $0x80] sm:$0xff]
        %v782 = vld [vmem:[#allocation8 + $0x88] sm:$0xff]
        %v783 = vld [vmem:[#allocation8 + $0x90] sm:$0xff]
        %v784 = vld [vmem:[#allocation8 + $0x98] sm:$0xff]
        %v785 = vld [vmem:[#allocation8 + $0xa0] sm:$0xff]
        %v786 = vld [vmem:[#allocation8 + $0xa8] sm:$0xff]
        %v787 = vld [vmem:[#allocation8 + $0xb0] sm:$0xff]
        %v788 = vld [vmem:[#allocation8 + $0xb8] sm:$0xff]
        %v789 = vld [vmem:[#allocation8 + $0xc0] sm:$0xff]
        %v790 = vld [vmem:[#allocation8 + $0xc8] sm:$0xff]
        %v791 = vld [vmem:[#allocation8 + $0xd0] sm:$0xff]
        %v792 = vld [vmem:[#allocation8 + $0xd8] sm:$0xff]
        %v793 = vld [vmem:[#allocation8 + $0xe0] sm:$0xff]
        %v794 = vld [vmem:[#allocation8 + $0xe8] sm:$0xff]
        %v795 = vld [vmem:[#allocation8 + $0xf0] sm:$0xff]
        %v796 = vld [vmem:[#allocation8 + $0xf8] sm:$0xff]
        %v797 = vld [vmem:[%s4] sm:$0x3]
        %v799 = vperm.slane %v797, 0
        %v800 = vperm.slane %v797, 1
        %v835 = vunpack.c.l.b16 %v765
        %v836 = vunpack.c.h.b16 %v765
        %v837 = vunpack.c.l.b16 %v766
        %v838 = vunpack.c.h.b16 %v766
        %v839 = vunpack.c.l.b16 %v767
        %v840 = vunpack.c.h.b16 %v767
        %v841 = vunpack.c.l.b16 %v768
        %v842 = vunpack.c.h.b16 %v768
        %v843 = vunpack.c.l.b16 %v769
        %v844 = vunpack.c.h.b16 %v769
        %v845 = vunpack.c.l.b16 %v770
        %v846 = vunpack.c.h.b16 %v770
        %v847 = vunpack.c.l.b16 %v771
        %v848 = vunpack.c.h.b16 %v771
        %v849 = vunpack.c.l.b16 %v772
        %v850 = vunpack.c.h.b16 %v772
        %v851 = vunpack.c.l.b16 %v773
        %v852 = vunpack.c.h.b16 %v773
        %v853 = vunpack.c.l.b16 %v774
        %v854 = vunpack.c.h.b16 %v774
        %v855 = vunpack.c.l.b16 %v775
        %v856 = vunpack.c.h.b16 %v775
        %v857 = vunpack.c.l.b16 %v776
        %v858 = vunpack.c.h.b16 %v776
        %v859 = vunpack.c.l.b16 %v777
        %v860 = vunpack.c.h.b16 %v777
        %v861 = vunpack.c.l.b16 %v778
        %v862 = vunpack.c.h.b16 %v778
        %v863 = vunpack.c.l.b16 %v779
        %v864 = vunpack.c.h.b16 %v779
        %v865 = vunpack.c.l.b16 %v780
        %v866 = vunpack.c.h.b16 %v780
        %v867 = vunpack.c.l.b16 %v781
        %v868 = vunpack.c.h.b16 %v781
        %v869 = vunpack.c.l.b16 %v782
        %v870 = vunpack.c.h.b16 %v782
        %v871 = vunpack.c.l.b16 %v783
        %v872 = vunpack.c.h.b16 %v783
        %v873 = vunpack.c.l.b16 %v784
        %v874 = vunpack.c.h.b16 %v784
        %v875 = vunpack.c.l.b16 %v785
        %v876 = vunpack.c.h.b16 %v785
        %v877 = vunpack.c.l.b16 %v786
        %v878 = vunpack.c.h.b16 %v786
        %v879 = vunpack.c.l.b16 %v787
        %v880 = vunpack.c.h.b16 %v787
        %v881 = vunpack.c.l.b16 %v788
        %v882 = vunpack.c.h.b16 %v788
        %v883 = vunpack.c.l.b16 %v789
        %v884 = vunpack.c.h.b16 %v789
        %v885 = vunpack.c.l.b16 %v790
        %v886 = vunpack.c.h.b16 %v790
        %v887 = vunpack.c.l.b16 %v791
        %v888 = vunpack.c.h.b16 %v791
        %v889 = vunpack.c.l.b16 %v792
        %v890 = vunpack.c.h.b16 %v792
        %v891 = vunpack.c.l.b16 %v793
        %v892 = vunpack.c.h.b16 %v793
        %v893 = vunpack.c.l.b16 %v794
        %v894 = vunpack.c.h.b16 %v794
        %v895 = vunpack.c.l.b16 %v795
        %v896 = vunpack.c.h.b16 %v795
        %v897 = vunpack.c.l.b16 %v796
        %v898 = vunpack.c.h.b16 %v796
        %v899 = vpack.c.b16 %v837, %v835
        %v900 = vpack.c.b16 %v838, %v836
        %v901 = vpack.c.b16 %v841, %v839
        %v902 = vpack.c.b16 %v842, %v840
        %v903 = vpack.c.b16 %v845, %v843
        %v904 = vpack.c.b16 %v846, %v844
        %v905 = vpack.c.b16 %v849, %v847
        %v906 = vpack.c.b16 %v850, %v848
        %v907 = vpack.c.b16 %v853, %v851
        %v908 = vpack.c.b16 %v854, %v852
        %v909 = vpack.c.b16 %v857, %v855
        %v910 = vpack.c.b16 %v858, %v856
        %v911 = vpack.c.b16 %v861, %v859
        %v912 = vpack.c.b16 %v862, %v860
        %v913 = vpack.c.b16 %v865, %v863
        %v914 = vpack.c.b16 %v866, %v864
        %v915 = vpack.c.b16 %v869, %v867
        %v916 = vpack.c.b16 %v870, %v868
        %v917 = vpack.c.b16 %v873, %v871
        %v918 = vpack.c.b16 %v874, %v872
        %v919 = vpack.c.b16 %v877, %v875
        %v920 = vpack.c.b16 %v878, %v876
        %v921 = vpack.c.b16 %v881, %v879
        %v922 = vpack.c.b16 %v882, %v880
        %v923 = vpack.c.b16 %v885, %v883
        %v924 = vpack.c.b16 %v886, %v884
        %v925 = vpack.c.b16 %v889, %v887
        %v926 = vpack.c.b16 %v890, %v888
        %v927 = vpack.c.b16 %v893, %v891
        %v928 = vpack.c.b16 %v894, %v892
        %v929 = vpack.c.b16 %v897, %v895
        %v930 = vpack.c.b16 %v898, %v896
        %963 = vmatpush.bf16.msra.mxu0 %v913
        %964 = vmatpush.bf16.msra.mxu0 %v911
        %965 = vmatpush.bf16.msra.mxu0 %v909
        %966 = vmatpush.bf16.msra.mxu0 %v907
        %967 = vmatpush.bf16.msra.mxu0 %v905
        %968 = vmatpush.bf16.msra.mxu0 %v903
        %969 = vmatpush.bf16.msra.mxu0 %v901
        %970 = vmatpush.bf16.msra.mxu0 %v899
        %971 = vmatmul.bf16.gmra.mxu0 %v749
        %v972 = vpop.f32.mrf.mxu0
        %v973 = vadd.f32 %v799, %v972
        %v974 = vpop.f32.mrf.mxu0
        %v975 = vadd.f32 %v799, %v974
        %976 = vmatmul.bf16.gmra.mxu0 %v751
        %v977 = vpop.f32.mrf.mxu0
        %v978 = vadd.f32 %v799, %v977
        %v979 = vpop.f32.mrf.mxu0
        %v980 = vadd.f32 %v799, %v979
        %981 = vmatmul.bf16.gmra.mxu0 %v753
        %v982 = vpop.f32.mrf.mxu0
        %v983 = vadd.f32 %v799, %v982
        %v984 = vpop.f32.mrf.mxu0
        %v985 = vadd.f32 %v799, %v984
        %986 = vmatmul.bf16.gmra.mxu0 %v755
        %v987 = vpop.f32.mrf.mxu0
        %v988 = vadd.f32 %v799, %v987
        %v989 = vpop.f32.mrf.mxu0
        %v990 = vadd.f32 %v799, %v989
        %991 = vmatmul.bf16.gmra.mxu0 %v757
        %v992 = vpop.f32.mrf.mxu0
        %v993 = vadd.f32 %v799, %v992
        %v994 = vpop.f32.mrf.mxu0
        %v995 = vadd.f32 %v799, %v994
        %996 = vmatmul.bf16.gmra.mxu0 %v759
        %v997 = vpop.f32.mrf.mxu0
        %v998 = vadd.f32 %v799, %v997
        %v999 = vpop.f32.mrf.mxu0
        %v1000 = vadd.f32 %v799, %v999
        %1001 = vmatmul.bf16.gmra.mxu0 %v761
        %v1002 = vpop.f32.mrf.mxu0
        %v1003 = vadd.f32 %v799, %v1002
        %v1004 = vpop.f32.mrf.mxu0
        %v1005 = vadd.f32 %v799, %v1004
        %1006 = vmatmul.bf16.gmra.mxu0 %v763
        %v1007 = vpop.f32.mrf.mxu0
        %v1008 = vadd.f32 %v799, %v1007
        %v1009 = vpop.f32.mrf.mxu0
        %v1010 = vadd.f32 %v799, %v1009
        %1011 = vdwg.mxu0
        %1012 = vmatpush.bf16.msra.mxu0 %v929
        %1013 = vmatpush.bf16.msra.mxu0 %v927
        %1014 = vmatpush.bf16.msra.mxu0 %v925
        %1015 = vmatpush.bf16.msra.mxu0 %v923
        %1016 = vmatpush.bf16.msra.mxu0 %v921
        %1017 = vmatpush.bf16.msra.mxu0 %v919
        %1018 = vmatpush.bf16.msra.mxu0 %v917
        %1019 = vmatpush.bf16.msra.mxu0 %v915
        %1020 = vmatmul.bf16.gmra.mxu0 %v750
        %v1021 = vpop.f32.mrf.mxu0
        %v1022 = vadd.f32 %v973, %v1021
        %v1023 = vpop.f32.mrf.mxu0
        %v1024 = vadd.f32 %v975, %v1023
        %1025 = vmatmul.bf16.gmra.mxu0 %v752
        %v1026 = vpop.f32.mrf.mxu0
        %v1027 = vadd.f32 %v978, %v1026
        %v1028 = vpop.f32.mrf.mxu0
        %v1029 = vadd.f32 %v980, %v1028
        %1030 = vmatmul.bf16.gmra.mxu0 %v754
        %v1031 = vpop.f32.mrf.mxu0
        %v1032 = vadd.f32 %v983, %v1031
        %v1033 = vpop.f32.mrf.mxu0
        %v1034 = vadd.f32 %v985, %v1033
        %1035 = vmatmul.bf16.gmra.mxu0 %v756
        %v1036 = vpop.f32.mrf.mxu0
        %v1037 = vadd.f32 %v988, %v1036
        %v1038 = vpop.f32.mrf.mxu0
        %v1039 = vadd.f32 %v990, %v1038
        %1040 = vmatmul.bf16.gmra.mxu0 %v758
        %v1041 = vpop.f32.mrf.mxu0
        %v1042 = vadd.f32 %v993, %v1041
        %v1043 = vpop.f32.mrf.mxu0
        %v1044 = vadd.f32 %v995, %v1043
        %1045 = vmatmul.bf16.gmra.mxu0 %v760
        %v1046 = vpop.f32.mrf.mxu0
        %v1047 = vadd.f32 %v998, %v1046
        %v1048 = vpop.f32.mrf.mxu0
        %v1049 = vadd.f32 %v1000, %v1048
        %1050 = vmatmul.bf16.gmra.mxu0 %v762
        %v1051 = vpop.f32.mrf.mxu0
        %v1052 = vadd.f32 %v1003, %v1051
        %v1053 = vpop.f32.mrf.mxu0
        %v1054 = vadd.f32 %v1005, %v1053
        %1055 = vmatmul.bf16.gmra.mxu0 %v764
        %v1056 = vpop.f32.mrf.mxu0
        %v1057 = vadd.f32 %v1008, %v1056
        %v1058 = vpop.f32.mrf.mxu0
        %v1059 = vadd.f32 %v1010, %v1058
        %1060 = vdwg.mxu0
        %1061 = vmatpush.bf16.msra.mxu0 %v914
        %1062 = vmatpush.bf16.msra.mxu0 %v912
        %1063 = vmatpush.bf16.msra.mxu0 %v910
        %1064 = vmatpush.bf16.msra.mxu0 %v908
        %1065 = vmatpush.bf16.msra.mxu0 %v906
        %1066 = vmatpush.bf16.msra.mxu0 %v904
        %1067 = vmatpush.bf16.msra.mxu0 %v902
        %1068 = vmatpush.bf16.msra.mxu0 %v900
        %1069 = vmatmul.bf16.gmra.mxu0 %v749
        %v1070 = vpop.f32.mrf.mxu0
        %v1071 = vadd.f32 %v800, %v1070
        %v1072 = vpop.f32.mrf.mxu0
        %v1073 = vadd.f32 %v800, %v1072
        %1074 = vmatmul.bf16.gmra.mxu0 %v751
        %v1075 = vpop.f32.mrf.mxu0
        %v1076 = vadd.f32 %v800, %v1075
        %v1077 = vpop.f32.mrf.mxu0
        %v1078 = vadd.f32 %v800, %v1077
        %1079 = vmatmul.bf16.gmra.mxu0 %v753
        %v1080 = vpop.f32.mrf.mxu0
        %v1081 = vadd.f32 %v800, %v1080
        %v1082 = vpop.f32.mrf.mxu0
        %v1083 = vadd.f32 %v800, %v1082
        %1084 = vmatmul.bf16.gmra.mxu0 %v755
        %v1085 = vpop.f32.mrf.mxu0
        %v1086 = vadd.f32 %v800, %v1085
        %v1087 = vpop.f32.mrf.mxu0
        %v1088 = vadd.f32 %v800, %v1087
        %1089 = vmatmul.bf16.gmra.mxu0 %v757
        %v1090 = vpop.f32.mrf.mxu0
        %v1091 = vadd.f32 %v800, %v1090
        %v1092 = vpop.f32.mrf.mxu0
        %v1093 = vadd.f32 %v800, %v1092
        %1094 = vmatmul.bf16.gmra.mxu0 %v759
        %v1095 = vpop.f32.mrf.mxu0
        %v1096 = vadd.f32 %v800, %v1095
        %v1097 = vpop.f32.mrf.mxu0
        %v1098 = vadd.f32 %v800, %v1097
        %1099 = vmatmul.bf16.gmra.mxu0 %v761
        %v1100 = vpop.f32.mrf.mxu0
        %v1101 = vadd.f32 %v800, %v1100
        %v1102 = vpop.f32.mrf.mxu0
        %v1103 = vadd.f32 %v800, %v1102
        %1104 = vmatmul.bf16.gmra.mxu0 %v763
        %v1105 = vpop.f32.mrf.mxu0
        %v1106 = vadd.f32 %v800, %v1105
        %v1107 = vpop.f32.mrf.mxu0
        %v1108 = vadd.f32 %v800, %v1107
        %1109 = vdwg.mxu0
        %1110 = vmatpush.bf16.msra.mxu0 %v930
        %1111 = vmatpush.bf16.msra.mxu0 %v928
        %1112 = vmatpush.bf16.msra.mxu0 %v926
        %1113 = vmatpush.bf16.msra.mxu0 %v924
        %1114 = vmatpush.bf16.msra.mxu0 %v922
        %1115 = vmatpush.bf16.msra.mxu0 %v920
        %1116 = vmatpush.bf16.msra.mxu0 %v918
        %1117 = vmatpush.bf16.msra.mxu0 %v916
        %1118 = vmatmul.bf16.gmra.mxu0 %v750
        %v1119 = vpop.f32.mrf.mxu0
        %v1120 = vadd.f32 %v1071, %v1119
        %v1121 = vpop.f32.mrf.mxu0
        %v1122 = vadd.f32 %v1073, %v1121
        %1123 = vmatmul.bf16.gmra.mxu0 %v752
        %v1124 = vpop.f32.mrf.mxu0
        %v1125 = vadd.f32 %v1076, %v1124
        %v1126 = vpop.f32.mrf.mxu0
        %v1127 = vadd.f32 %v1078, %v1126
        %1128 = vmatmul.bf16.gmra.mxu0 %v754
        %v1129 = vpop.f32.mrf.mxu0
        %v1130 = vadd.f32 %v1081, %v1129
        %v1131 = vpop.f32.mrf.mxu0
        %v1132 = vadd.f32 %v1083, %v1131
        %1133 = vmatmul.bf16.gmra.mxu0 %v756
        %v1134 = vpop.f32.mrf.mxu0
        %v1135 = vadd.f32 %v1086, %v1134
        %v1136 = vpop.f32.mrf.mxu0
        %v1137 = vadd.f32 %v1088, %v1136
        %1138 = vmatmul.bf16.gmra.mxu0 %v758
        %v1139 = vpop.f32.mrf.mxu0
        %v1140 = vadd.f32 %v1091, %v1139
        %v1141 = vpop.f32.mrf.mxu0
        %v1142 = vadd.f32 %v1093, %v1141
        %1143 = vmatmul.bf16.gmra.mxu0 %v760
        %v1144 = vpop.f32.mrf.mxu0
        %v1145 = vadd.f32 %v1096, %v1144
        %v1146 = vpop.f32.mrf.mxu0
        %v1147 = vadd.f32 %v1098, %v1146
        %1148 = vmatmul.bf16.gmra.mxu0 %v762
        %v1149 = vpop.f32.mrf.mxu0
        %v1150 = vadd.f32 %v1101, %v1149
        %v1151 = vpop.f32.mrf.mxu0
        %v1152 = vadd.f32 %v1103, %v1151
        %1153 = vmatmul.bf16.gmra.mxu0 %v764
        %v1154 = vpop.f32.mrf.mxu0
        %v1155 = vadd.f32 %v1106, %v1154
        %v1156 = vpop.f32.mrf.mxu0
        %v1157 = vadd.f32 %v1108, %v1156
        %1158 = vdwg.mxu0
        %v1159 = vadd.f32 %v1022, %v629
        %v1160 = vadd.f32 %v1120, %v678
        %v1161 = vadd.f32 %v1024, %v631
        %v1162 = vadd.f32 %v1122, %v680
        %v1163 = vadd.f32 %v1027, %v634
        %v1164 = vadd.f32 %v1125, %v683
        %v1165 = vadd.f32 %v1029, %v636
        %v1166 = vadd.f32 %v1127, %v685
        %v1167 = vadd.f32 %v1032, %v639
        %v1168 = vadd.f32 %v1130, %v688
        %v1169 = vadd.f32 %v1034, %v641
        %v1170 = vadd.f32 %v1132, %v690
        %v1171 = vadd.f32 %v1037, %v644
        %v1172 = vadd.f32 %v1135, %v693
        %v1173 = vadd.f32 %v1039, %v646
        %v1174 = vadd.f32 %v1137, %v695
        %v1175 = vadd.f32 %v1042, %v649
        %v1176 = vadd.f32 %v1140, %v698
        %v1177 = vadd.f32 %v1044, %v651
        %v1178 = vadd.f32 %v1142, %v700
        %v1179 = vadd.f32 %v1047, %v654
        %v1180 = vadd.f32 %v1145, %v703
        %v1181 = vadd.f32 %v1049, %v656
        %v1182 = vadd.f32 %v1147, %v705
        %v1183 = vadd.f32 %v1052, %v659
        %v1184 = vadd.f32 %v1150, %v708
        %v1185 = vadd.f32 %v1054, %v661
        %v1186 = vadd.f32 %v1152, %v710
        %v1187 = vadd.f32 %v1057, %v664
        %v1188 = vadd.f32 %v1155, %v713
        %v1189 = vadd.f32 %v1059, %v666
        %v1190 = vadd.f32 %v1157, %v715
        %v1191 = vmax.f32 %v1159, 0.0
        %v1192 = vmax.f32 %v1160, 0.0
        %v1193 = vmax.f32 %v1161, 0.0
        %v1194 = vmax.f32 %v1162, 0.0
        %v1195 = vmax.f32 %v1163, 0.0
        %v1196 = vmax.f32 %v1164, 0.0
        %v1197 = vmax.f32 %v1165, 0.0
        %v1198 = vmax.f32 %v1166, 0.0
        %v1199 = vmax.f32 %v1167, 0.0
        %v1200 = vmax.f32 %v1168, 0.0
        %v1201 = vmax.f32 %v1169, 0.0
        %v1202 = vmax.f32 %v1170, 0.0
        %v1203 = vmax.f32 %v1171, 0.0
        %v1204 = vmax.f32 %v1172, 0.0
        %v1205 = vmax.f32 %v1173, 0.0
        %v1206 = vmax.f32 %v1174, 0.0
        %v1207 = vmax.f32 %v1175, 0.0
        %v1208 = vmax.f32 %v1176, 0.0
        %v1209 = vmax.f32 %v1177, 0.0
        %v1210 = vmax.f32 %v1178, 0.0
        %v1211 = vmax.f32 %v1179, 0.0
        %v1212 = vmax.f32 %v1180, 0.0
        %v1213 = vmax.f32 %v1181, 0.0
        %v1214 = vmax.f32 %v1182, 0.0
        %v1215 = vmax.f32 %v1183, 0.0
        %v1216 = vmax.f32 %v1184, 0.0
        %v1217 = vmax.f32 %v1185, 0.0
        %v1218 = vmax.f32 %v1186, 0.0
        %v1219 = vmax.f32 %v1187, 0.0
        %v1220 = vmax.f32 %v1188, 0.0
        %v1221 = vmax.f32 %v1189, 0.0
        %v1222 = vmax.f32 %v1190, 0.0
        %1223 = vst [vmem:[%s292] sm:$0xff] %v1191
        %1224 = vst [vmem:[%s292 + $0x8] sm:$0xff] %v1192
        %1225 = vst [vmem:[%s292 + $0x10] sm:$0xff] %v1193
        %1226 = vst [vmem:[%s292 + $0x18] sm:$0xff] %v1194
        %1227 = vst [vmem:[%s292 + $0x20] sm:$0xff] %v1195
        %1228 = vst [vmem:[%s292 + $0x28] sm:$0xff] %v1196
        %1229 = vst [vmem:[%s292 + $0x30] sm:$0xff] %v1197
        %1230 = vst [vmem:[%s292 + $0x38] sm:$0xff] %v1198
        %1231 = vst [vmem:[%s292 + $0x40] sm:$0xff] %v1199
        %1232 = vst [vmem:[%s292 + $0x48] sm:$0xff] %v1200
        %1233 = vst [vmem:[%s292 + $0x50] sm:$0xff] %v1201
        %1234 = vst [vmem:[%s292 + $0x58] sm:$0xff] %v1202
        %1235 = vst [vmem:[%s292 + $0x60] sm:$0xff] %v1203
        %1236 = vst [vmem:[%s292 + $0x68] sm:$0xff] %v1204
        %1237 = vst [vmem:[%s292 + $0x70] sm:$0xff] %v1205
        %1238 = vst [vmem:[%s292 + $0x78] sm:$0xff] %v1206
        %1239 = vst [vmem:[%s292 + $0x80] sm:$0xff] %v1207
        %1240 = vst [vmem:[%s292 + $0x88] sm:$0xff] %v1208
        %1241 = vst [vmem:[%s292 + $0x90] sm:$0xff] %v1209
        %1242 = vst [vmem:[%s292 + $0x98] sm:$0xff] %v1210
        %1243 = vst [vmem:[%s292 + $0xa0] sm:$0xff] %v1211
        %1244 = vst [vmem:[%s292 + $0xa8] sm:$0xff] %v1212
        %1245 = vst [vmem:[%s292 + $0xb0] sm:$0xff] %v1213
        %1246 = vst [vmem:[%s292 + $0xb8] sm:$0xff] %v1214
        %1247 = vst [vmem:[%s292 + $0xc0] sm:$0xff] %v1215
        %1248 = vst [vmem:[%s292 + $0xc8] sm:$0xff] %v1216
        %1249 = vst [vmem:[%s292 + $0xd0] sm:$0xff] %v1217
        %1250 = vst [vmem:[%s292 + $0xd8] sm:$0xff] %v1218
        %1251 = vst [vmem:[%s292 + $0xe0] sm:$0xff] %v1219
        %1252 = vst [vmem:[%s292 + $0xe8] sm:$0xff] %v1220
        %1253 = vst [vmem:[%s292 + $0xf0] sm:$0xff] %v1221
        %1254 = vst [vmem:[%s292 + $0xf8] sm:$0xff] %v1222
        %s1255 = sand.u32 %s142, 1
        %s1256 = scalar_lea.sflag [#allocation4], %s1255
        %s1257 = sand.u32 %s142, 1
        %s1258 = smul.addr %s1257, 256
        %s1259 = scalar_lea.vmem [#allocation10], %s1258
        // Predicated region
        $region57: #{tpu_custom_call.1} parent=39 // pred_check
          %p1260 = pneg %p152
        $region58: #{tpu_custom_call.1} parent=39 // pred_check_branch
          %1262 = sbr.rel (%p1260) target = $region60
        $region59: #{tpu_custom_call.1} parent=39 // pred_region
          %s1263 = smul.u32 16, %s24
          %1265 = vsyncadd %s1256, 0
          %s1266 = smul.addr %s1263, 2
          %s1267 = smul.addr %s1266, 8
          %s1268 = scalar_lea.hbm %s5, %s1267
          %s1269 = sshll.u32 %s1259, 4
          %s1270 = int_to_ptr.vmem [resolvable:$true] %s1269
          %s1271 = sshll.u32 %s1268, 4
          %s1272 = int_to_ptr.hbm [resolvable:$true] %s1271
          %1277 = dma.vmem_to_hbm [thread:$0]  %s1270, 4096, %s1272, %s1256, 256, 256, 16
        $region60: #{tpu_custom_call.1} parent=39 // pred_fallthru
          _
      $region40: #{tpu_custom_call.1} parent=5 // pred_fallthru
        _
      %p1278 = scmp.le.s32.totalorder 2, %s19
      // Predicated region
      $region61: #{tpu_custom_call.1} parent=5 // pred_check
        %p1279 = pneg %p1278
      $region62: #{tpu_custom_call.1} parent=5 // pred_check_branch
        %1281 = sbr.rel (%p1279) target = $region64
      $region63: #{tpu_custom_call.1} parent=5 // pred_region
        %s1282 = ssub.s32 %s19, 2
        // Predicated region
        $region65: #{tpu_custom_call.1} parent=63 // pred_check
          %p1283 = pneg %p158
        $region66: #{tpu_custom_call.1} parent=63 // pred_check_branch
          %1285 = sbr.rel (%p1283) target = $region68
        $region67: #{tpu_custom_call.1} parent=63 // pred_region
          %s1286 = sand.u32 %s143, 1
          %s1287 = scalar_lea.sflag [#allocation4], %s1286
          %s1288 = sand.u32 %s143, 1
          %s1289 = smul.addr %s1288, 256
          %s1290 = scalar_lea.vmem [#allocation10], %s1289
          %1292 = dma.done %s1287, 4096
        $region68: #{tpu_custom_call.1} parent=63 // pred_fallthru
          _
      $region64: #{tpu_custom_call.1} parent=5 // pred_fallthru
        _
    $region6: #{tpu_custom_call.1} parent=1 // loop_footer
      %s23 = sadd.s32 1, %s19
    $region7: #{tpu_custom_call.1} parent=1 // loop_footer_branch
      %18 = sbr.rel target = $region3
    $region8: #{tpu_custom_call.1} parent=1 // loop_exit
      _
    %1293 = vsyncpa [#allocation3], 1
    %s1294 = scalar_lea.sflag [#allocation3], 1
    %1295 = vsyncpa %s1294, 1
    %1296 = vsyncpa [#allocation6], 1
    %1297 = vsyncpa [#allocation9], 1
    %1298 = vsyncpa [#allocation4], 1
    %s1299 = scalar_lea.sflag [#allocation4], 1
    %1300 = vsyncpa %s1299, 1

</llo_original>
